<compile_context>
chip_gen: v7x
topology: tpu7x:2x2x1
jax: 0.10.0
libtpu: 0.0.40
codegen_flags: <defaults>
</compile_context>

<pallas_src>
import functools

import jax
import jax.numpy as jnp
from jax.experimental import pallas as pl
from jax.experimental.pallas import tpu as pltpu

LANE = 128     # lane-dense output width (Cout / latent padded to this)
TM_MAX = 512   # M tile for the pipelined GEMM


# ---------------------------------------------------------------------------
# Pallas kernels
# ---------------------------------------------------------------------------
def _gemm_bias_relu_kernel(a_ref, w_ref, b_ref, o_ref, *, relu):
    acc = jnp.dot(a_ref[...], w_ref[...], preferred_element_type=jnp.float32)
    acc = acc + b_ref[...]                       # (1, N) f32 bias broadcast
    if relu:
        acc = jnp.maximum(acc, 0.0)
    o_ref[...] = acc.astype(o_ref.dtype)


def gemm_bias_relu(a, w, b2d, *, relu=True, out_dtype=jnp.bfloat16):
    """a: [M, K] bf16, w: [K, N] bf16 (N multiple of 128), b2d: [1, N] f32."""
    M, K = a.shape
    K2, N = w.shape
    assert K == K2 and N % LANE == 0, (K, K2, N)
    # Full M when small (block == full dim, no (8,128) issue); otherwise a
    # 512-row tile streamed over M with double-buffered auto-pipelining.
    tm = M if M <= TM_MAX else TM_MAX
    grid = (pl.cdiv(M, tm),)
    bytes_accessed = int(a.size * a.dtype.itemsize + w.size * w.dtype.itemsize
                         + b2d.size * b2d.dtype.itemsize
                         + M * N * jnp.dtype(out_dtype).itemsize)
    return pl.pallas_call(
        functools.partial(_gemm_bias_relu_kernel, relu=relu),
        out_shape=jax.ShapeDtypeStruct((M, N), out_dtype),
        grid=grid,
        in_specs=[
            pl.BlockSpec((tm, K), lambda i: (i, 0)),   # A streamed over M
            pl.BlockSpec((K, N), lambda i: (0, 0)),    # W resident
            pl.BlockSpec((1, N), lambda i: (0, 0)),    # bias resident
        ],
        out_specs=pl.BlockSpec((tm, N), lambda i: (i, 0)),
        compiler_params=pltpu.CompilerParams(
            dimension_semantics=("parallel",),          # 2 TCs on v7x; neutral elsewhere
            vmem_limit_bytes=32 * 1024 * 1024,          # fits v7x scoped VMEM
        ),
        cost_estimate=pl.CostEstimate(
            flops=2 * M * K * N, transcendentals=0, bytes_accessed=bytes_accessed),
    )(a, w, b2d)


def _fused_tail_kernel(a_ref, w3_ref, b3_ref, w4_ref, b4_ref, o_ref):
    # conv3 (1x1 spatial -> plain GEMM) + Linear head + ReLUs in one launch.
    h = jnp.dot(a_ref[...], w3_ref[...], preferred_element_type=jnp.float32)
    h = jnp.maximum(h + b3_ref[...], 0.0).astype(w4_ref.dtype)
    o = jnp.dot(h, w4_ref[...], preferred_element_type=jnp.float32)
    o = jnp.maximum(o + b4_ref[...], 0.0)
    o_ref[...] = o.astype(o_ref.dtype)


def fused_conv3_head(a, w3, b3, w4, b4):
    M, K = a.shape
    N3 = w3.shape[1]
    N4 = w4.shape[1]
    tm = M if M <= TM_MAX else TM_MAX
    grid = (pl.cdiv(M, tm),)
    flops = 2 * M * K * N3 + 2 * M * N3 * N4
    bytes_accessed = int(a.size * a.dtype.itemsize
                         + w3.size * w3.dtype.itemsize + w4.size * w4.dtype.itemsize
                         + (b3.size + b4.size) * 4 + M * N4 * 4)
    return pl.pallas_call(
        _fused_tail_kernel,
        out_shape=jax.ShapeDtypeStruct((M, N4), jnp.float32),
        grid=grid,
        in_specs=[
            pl.BlockSpec((tm, K), lambda i: (i, 0)),
            pl.BlockSpec((K, N3), lambda i: (0, 0)),
            pl.BlockSpec((1, N3), lambda i: (0, 0)),
            pl.BlockSpec((N3, N4), lambda i: (0, 0)),
            pl.BlockSpec((1, N4), lambda i: (0, 0)),
        ],
        out_specs=pl.BlockSpec((tm, N4), lambda i: (i, 0)),
        compiler_params=pltpu.CompilerParams(
            dimension_semantics=("parallel",),
            vmem_limit_bytes=32 * 1024 * 1024,
        ),
        cost_estimate=pl.CostEstimate(
            flops=flops, transcendentals=0, bytes_accessed=bytes_accessed),
    )(a, w3, b3, w4, b4)


# ---------------------------------------------------------------------------
# NHWC im2col (plain-JAX glue: strided slices + one concat, no transposes)
# ---------------------------------------------------------------------------
def _im2col_nhwc(x, k, stride):
    """x: [B,H,W,C] -> ([B*Ho*Wo, k*k*C], (B, Ho, Wo)); K ordered (ki, kj, c)."""
    B, H, W, C = x.shape
    Ho = (H - k) // stride + 1
    Wo = (W - k) // stride + 1
    cols = [x[:, di:di + stride * Ho:stride, dj:dj + stride * Wo:stride, :]
            for di in range(k) for dj in range(k)]
    patches = jnp.concatenate(cols, axis=-1)            # [B, Ho, Wo, k*k*C]
    return patches.reshape(B * Ho * Wo, k * k * C), (B, Ho, Wo)


def conv2d_relu_nhwc(x, w_mat, b2d, *, k, stride):
    patches, (B, Ho, Wo) = _im2col_nhwc(x, k, stride)
    out = gemm_bias_relu(patches, w_mat, b2d, relu=True, out_dtype=jnp.bfloat16)
    return out.reshape(B, Ho, Wo, -1)                   # channels padded to LANE


# ---------------------------------------------------------------------------
# Parameters: torch-style init, then one-time GEMM-ready re-layout
# ---------------------------------------------------------------------------
def _uniform(key, shape, fan_in):
    bound = 1.0 / jnp.sqrt(jnp.float32(fan_in))
    return jax.random.uniform(key, shape, jnp.float32, -bound, bound)


def init_raw_params(key, latent_dim, flat_dim):
    keys = jax.random.split(key, 8)
    p = {}
    p["w1"] = _uniform(keys[0], (32, 3, 8, 8), 3 * 8 * 8)
    p["b1"] = _uniform(keys[1], (32,), 3 * 8 * 8)
    p["w2"] = _uniform(keys[2], (64, 32, 4, 4), 32 * 4 * 4)
    p["b2"] = _uniform(keys[3], (64,), 32 * 4 * 4)
    p["w3"] = _uniform(keys[4], (64, 64, 3, 3), 64 * 3 * 3)
    p["b3"] = _uniform(keys[5], (64,), 64 * 3 * 3)
    p["w4"] = _uniform(keys[6], (latent_dim, flat_dim), flat_dim)  # torch Linear [out, in]
    p["b4"] = _uniform(keys[7], (latent_dim,), flat_dim)
    return p


def _prep_conv(w, b, *, cin_pad, fold=1.0):
    """torch conv weight [Cout,Cin,k,k] -> bf16 [k*k*cin_pad, LANE], f32 bias [1, LANE]."""
    cout, cin, k, _ = w.shape
    w = w * fold
    w = jnp.pad(w, ((0, 0), (0, cin_pad - cin), (0, 0), (0, 0)))        # zero rows for pad channels
    w = jnp.transpose(w, (2, 3, 1, 0)).reshape(k * k * cin_pad, cout)   # K order (ki, kj, c)
    w = jnp.pad(w, ((0, 0), (0, LANE - cout)))                          # lane-dense Cout
    b = jnp.pad(b, (0, LANE - cout)).reshape(1, LANE)
    return w.astype(jnp.bfloat16), b.astype(jnp.float32)


def prepare_params(raw, latent_dim, hf, wf):
    assert latent_dim <= LANE
    p = {}
    # conv1: fold the /255 normalization into the weights (conv is linear in x).
    p["w1"], p["b1"] = _prep_conv(raw["w1"], raw["b1"], cin_pad=3, fold=1.0 / 255.0)
    p["w2"], p["b2"] = _prep_conv(raw["w2"], raw["b2"], cin_pad=LANE)
    p["w3"], p["b3"] = _prep_conv(raw["w3"], raw["b3"], cin_pad=LANE)
    # Head: torch flatten is NCHW (c, hf, wf); re-order K to NHWC (hf, wf, c_padded).
    w4 = raw["w4"].reshape(latent_dim, 64, hf, wf)
    w4 = jnp.transpose(w4, (0, 2, 3, 1))                                 # -> (hf, wf, c)
    w4 = jnp.pad(w4, ((0, 0), (0, 0), (0, 0), (0, LANE - 64)))
    w4 = w4.reshape(latent_dim, hf * wf * LANE).T                        # [K, latent]
    w4 = jnp.pad(w4, ((0, 0), (0, LANE - latent_dim)))
    b4 = jnp.pad(raw["b4"], (0, LANE - latent_dim)).reshape(1, LANE)
    p["w4"], p["b4"] = w4.astype(jnp.bfloat16), b4.astype(jnp.float32)
    return p


# ---------------------------------------------------------------------------
# Encoder.forward equivalent (NHWC in, [B, latent_dim] f32 out)
# ---------------------------------------------------------------------------
def encoder_forward(params, x_nhwc, latent_dim):
    # torch: self.encoder(x.permute((0,3,1,2)) / 255.0) — permute and /255 are
    # absorbed into the prepared weights; pixel integers 0..255 are exact in bf16.
    x = x_nhwc.astype(jnp.bfloat16)
    x = conv2d_relu_nhwc(x, params["w1"], params["b1"], k=8, stride=4)
    x = conv2d_relu_nhwc(x, params["w2"], params["b2"], k=4, stride=2)
    B, H3, W3, _ = x.shape
    Hf = (H3 - 3) + 1
    Wf = (W3 - 3) + 1
    patches, _ = _im2col_nhwc(x, 3, 1)                 # [B*Hf*Wf, 9*LANE]
    if Hf == 1 and Wf == 1:
        # conv3 collapses to a Linear over its patches -> fuse with the head.
        out = fused_conv3_head(patches, params["w3"], params["b3"],
                               params["w4"], params["b4"])
    else:
        h = gemm_bias_relu(patches, params["w3"], params["b3"],
                           relu=True, out_dtype=jnp.bfloat16)
        h = h.reshape(B, Hf * Wf * LANE)               # NHWC flatten; w4 K re-ordered to match
        out = gemm_bias_relu(h, params["w4"], params["b4"],
                             relu=True, out_dtype=jnp.float32)
    return out[:, :latent_dim]


if __name__ == "__main__":
    latent_dim = 32
    batch = 2
    H = W = 36  # 36 -> conv8/s4 -> 8 -> conv4/s2 -> 3 -> conv3/s1 -> 1

    key = jax.random.PRNGKey(0)
    kx, kp = jax.random.split(key)

    # NHWC uint8-valued image input, as Encoder.forward expects.
    x = jax.random.randint(kx, (batch, H, W, 3), 0, 256).astype(jnp.float32)

    hf = wf = 1
    flat_dim = 64 * hf * wf
    raw = init_raw_params(kp, latent_dim, flat_dim)
    params = prepare_params(raw, latent_dim, hf, wf)

    fwd = jax.jit(lambda p, xin: encoder_forward(p, xin, latent_dim))
    out = fwd(params, x)
    out = jax.block_until_ready(out)
    assert out.shape == (batch, latent_dim), out.shape
    assert out.dtype == jnp.float32
    print("KERNEL_OK")
</pallas_src>

<mosaic_0001>
module attributes {stable_mosaic.version = 11 : i64} {
  func.func @_gemm_bias_relu_kernel(%arg0: i32, %arg1: memref<128x192xbf16, #tpu.memory_space<vmem>>, %arg2: memref<192x128xbf16, #tpu.memory_space<vmem>>, %arg3: memref<1x128xf32, #tpu.memory_space<vmem>>, %arg4: memref<128x128xbf16, #tpu.memory_space<vmem>>) attributes {dimension_semantics = [#tpu.dimension_semantics<parallel>], iteration_bounds = array<i64: 1>, scalar_prefetch = 0 : i64, scratch_operands = 0 : i64, tpu.core_type = #tpu.core_type<tc>, window_params = [{transform_indices = @transform_0, window_bounds = array<i64: 128, 192>}, {pipeline_mode = #tpu.pipeline_mode<synchronous>, transform_indices = @transform_1, window_bounds = array<i64: 192, 128>}, {pipeline_mode = #tpu.pipeline_mode<synchronous>, transform_indices = @transform_2, window_bounds = array<i64: 1, 128>}, {transform_indices = @transform_3, window_bounds = array<i64: 128, 128>}]} {
    %c0 = arith.constant 0 : index
    %c0_0 = arith.constant 0 : index
    %0 = vector.load %arg1[%c0, %c0_0] : memref<128x192xbf16, #tpu.memory_space<vmem>>, vector<128x192xbf16>
    %c0_1 = arith.constant 0 : index
    %c0_2 = arith.constant 0 : index
    %1 = vector.load %arg2[%c0_1, %c0_2] : memref<192x128xbf16, #tpu.memory_space<vmem>>, vector<192x128xbf16>
    %cst = arith.constant dense<0.000000e+00> : vector<128x128xf32>
    %2 = tpu.matmul %0, %1, %cst {dimension_numbers = #tpu.dot_dimension_numbers<[1], [0], [0], [1], [0, 0, 1, 1], [], []>} : vector<128x192xbf16>, vector<192x128xbf16>, vector<128x128xf32> -> vector<128x128xf32>
    %c0_3 = arith.constant 0 : index
    %c0_4 = arith.constant 0 : index
    %3 = vector.load %arg3[%c0_3, %c0_4] : memref<1x128xf32, #tpu.memory_space<vmem>>, vector<1x128xf32>
    %4 = vector.broadcast %3 : vector<1x128xf32> to vector<128x128xf32>
    %5 = arith.addf %2, %4 : vector<128x128xf32>
    %cst_5 = arith.constant 0.000000e+00 : f32
    %6 = vector.broadcast %cst_5 : f32 to vector<128x128xf32>
    %7 = arith.maximumf %5, %6 : vector<128x128xf32>
    %8 = arith.truncf %7 : vector<128x128xf32> to vector<128x128xbf16>
    %c0_6 = arith.constant 0 : index
    %c0_7 = arith.constant 0 : index
    %9 = vector.load %arg4[%c0_6, %c0_7] : memref<128x128xbf16, #tpu.memory_space<vmem>>, vector<128x128xbf16>
    tpu.vector_store %arg4[%c0_6, %c0_7], %8 {strides = array<i32>} : memref<128x128xbf16, #tpu.memory_space<vmem>>, vector<128x128xbf16>,
    return
  }
  func.func @transform_0(%arg0: i32) -> (i32, i32) {
    %c0_i32 = arith.constant 0 : i32
    %c0_i32_0 = arith.constant 0 : i32
    return %arg0, %c0_i32 : i32, i32
  }
  func.func @transform_1(%arg0: i32) -> (i32, i32) {
    %c0_i32 = arith.constant 0 : i32
    %c0_i32_0 = arith.constant 0 : i32
    %c0_i32_1 = arith.constant 0 : i32
    return %c0_i32, %c0_i32_0 : i32, i32
  }
  func.func @transform_2(%arg0: i32) -> (i32, i32) {
    %c0_i32 = arith.constant 0 : i32
    %c0_i32_0 = arith.constant 0 : i32
    %c0_i32_1 = arith.constant 0 : i32
    return %c0_i32, %c0_i32_0 : i32, i32
  }
  func.func @transform_3(%arg0: i32) -> (i32, i32) {
    %c0_i32 = arith.constant 0 : i32
    %c0_i32_0 = arith.constant 0 : i32
    return %arg0, %c0_i32 : i32, i32
  }
}

module attributes {stable_mosaic.version = 11 : i64} {
  func.func @_gemm_bias_relu_kernel(%arg0: i32, %arg1: memref<18x2048xbf16, #tpu.memory_space<vmem>>, %arg2: memref<2048x128xbf16, #tpu.memory_space<vmem>>, %arg3: memref<1x128xf32, #tpu.memory_space<vmem>>, %arg4: memref<18x128xbf16, #tpu.memory_space<vmem>>) attributes {dimension_semantics = [#tpu.dimension_semantics<parallel>], iteration_bounds = array<i64: 1>, scalar_prefetch = 0 : i64, scratch_operands = 0 : i64, tpu.core_type = #tpu.core_type<tc>, window_params = [{transform_indices = @transform_0, window_bounds = array<i64: 18, 2048>}, {pipeline_mode = #tpu.pipeline_mode<synchronous>, transform_indices = @transform_1, window_bounds = array<i64: 2048, 128>}, {pipeline_mode = #tpu.pipeline_mode<synchronous>, transform_indices = @transform_2, window_bounds = array<i64: 1, 128>}, {transform_indices = @transform_3, window_bounds = array<i64: 18, 128>}]} {
    %c0 = arith.constant 0 : index
    %c0_0 = arith.constant 0 : index
    %0 = vector.load %arg1[%c0, %c0_0] : memref<18x2048xbf16, #tpu.memory_space<vmem>>, vector<18x2048xbf16>
    %c0_1 = arith.constant 0 : index
    %c0_2 = arith.constant 0 : index
    %1 = vector.load %arg2[%c0_1, %c0_2] : memref<2048x128xbf16, #tpu.memory_space<vmem>>, vector<2048x128xbf16>
    %cst = arith.constant dense<0.000000e+00> : vector<18x128xf32>
    %2 = tpu.matmul %0, %1, %cst {dimension_numbers = #tpu.dot_dimension_numbers<[1], [0], [0], [1], [0, 0, 1, 1], [], []>} : vector<18x2048xbf16>, vector<2048x128xbf16>, vector<18x128xf32> -> vector<18x128xf32>
    %c0_3 = arith.constant 0 : index
    %c0_4 = arith.constant 0 : index
    %3 = vector.load %arg3[%c0_3, %c0_4] : memref<1x128xf32, #tpu.memory_space<vmem>>, vector<1x128xf32>
    %4 = vector.broadcast %3 : vector<1x128xf32> to vector<18x128xf32>
    %5 = arith.addf %2, %4 : vector<18x128xf32>
    %cst_5 = arith.constant 0.000000e+00 : f32
    %6 = vector.broadcast %cst_5 : f32 to vector<18x128xf32>
    %7 = arith.maximumf %5, %6 : vector<18x128xf32>
    %8 = arith.truncf %7 : vector<18x128xf32> to vector<18x128xbf16>
    %c0_6 = arith.constant 0 : index
    %c0_7 = arith.constant 0 : index
    %9 = vector.load %arg4[%c0_6, %c0_7] : memref<18x128xbf16, #tpu.memory_space<vmem>>, vector<18x128xbf16>
    tpu.vector_store %arg4[%c0_6, %c0_7], %8 {strides = array<i32>} : memref<18x128xbf16, #tpu.memory_space<vmem>>, vector<18x128xbf16>,
    return
  }
  func.func @transform_0(%arg0: i32) -> (i32, i32) {
    %c0_i32 = arith.constant 0 : i32
    %c0_i32_0 = arith.constant 0 : i32
    return %arg0, %c0_i32 : i32, i32
  }
  func.func @transform_1(%arg0: i32) -> (i32, i32) {
    %c0_i32 = arith.constant 0 : i32
    %c0_i32_0 = arith.constant 0 : i32
    %c0_i32_1 = arith.constant 0 : i32
    return %c0_i32, %c0_i32_0 : i32, i32
  }
  func.func @transform_2(%arg0: i32) -> (i32, i32) {
    %c0_i32 = arith.constant 0 : i32
    %c0_i32_0 = arith.constant 0 : i32
    %c0_i32_1 = arith.constant 0 : i32
    return %c0_i32, %c0_i32_0 : i32, i32
  }
  func.func @transform_3(%arg0: i32) -> (i32, i32) {
    %c0_i32 = arith.constant 0 : i32
    %c0_i32_0 = arith.constant 0 : i32
    return %arg0, %c0_i32 : i32, i32
  }
}

module attributes {stable_mosaic.version = 11 : i64} {
  func.func @_fused_tail_kernel(%arg0: i32, %arg1: memref<2x1152xbf16, #tpu.memory_space<vmem>>, %arg2: memref<1152x128xbf16, #tpu.memory_space<vmem>>, %arg3: memref<1x128xf32, #tpu.memory_space<vmem>>, %arg4: memref<128x128xbf16, #tpu.memory_space<vmem>>, %arg5: memref<1x128xf32, #tpu.memory_space<vmem>>, %arg6: memref<2x128xf32, #tpu.memory_space<vmem>>) attributes {dimension_semantics = [#tpu.dimension_semantics<parallel>], iteration_bounds = array<i64: 1>, scalar_prefetch = 0 : i64, scratch_operands = 0 : i64, tpu.core_type = #tpu.core_type<tc>, window_params = [{transform_indices = @transform_0, window_bounds = array<i64: 2, 1152>}, {pipeline_mode = #tpu.pipeline_mode<synchronous>, transform_indices = @transform_1, window_bounds = array<i64: 1152, 128>}, {pipeline_mode = #tpu.pipeline_mode<synchronous>, transform_indices = @transform_2, window_bounds = array<i64: 1, 128>}, {pipeline_mode = #tpu.pipeline_mode<synchronous>, transform_indices = @transform_3, window_bounds = array<i64: 128, 128>}, {pipeline_mode = #tpu.pipeline_mode<synchronous>, transform_indices = @transform_4, window_bounds = array<i64: 1, 128>}, {transform_indices = @transform_5, window_bounds = array<i64: 2, 128>}]} {
    %c0 = arith.constant 0 : index
    %c0_0 = arith.constant 0 : index
    %0 = vector.load %arg1[%c0, %c0_0] : memref<2x1152xbf16, #tpu.memory_space<vmem>>, vector<2x1152xbf16>
    %c0_1 = arith.constant 0 : index
    %c0_2 = arith.constant 0 : index
    %1 = vector.load %arg2[%c0_1, %c0_2] : memref<1152x128xbf16, #tpu.memory_space<vmem>>, vector<1152x128xbf16>
    %cst = arith.constant dense<0.000000e+00> : vector<2x128xf32>
    %2 = tpu.matmul %0, %1, %cst {dimension_numbers = #tpu.dot_dimension_numbers<[1], [0], [0], [1], [0, 0, 1, 1], [], []>} : vector<2x1152xbf16>, vector<1152x128xbf16>, vector<2x128xf32> -> vector<2x128xf32>
    %c0_3 = arith.constant 0 : index
    %c0_4 = arith.constant 0 : index
    %3 = vector.load %arg3[%c0_3, %c0_4] : memref<1x128xf32, #tpu.memory_space<vmem>>, vector<1x128xf32>
    %4 = vector.broadcast %3 : vector<1x128xf32> to vector<2x128xf32>
    %5 = arith.addf %2, %4 : vector<2x128xf32>
    %cst_5 = arith.constant 0.000000e+00 : f32
    %6 = vector.broadcast %cst_5 : f32 to vector<2x128xf32>
    %7 = arith.maximumf %5, %6 : vector<2x128xf32>
    %8 = arith.truncf %7 : vector<2x128xf32> to vector<2x128xbf16>
    %c0_6 = arith.constant 0 : index
    %c0_7 = arith.constant 0 : index
    %9 = vector.load %arg4[%c0_6, %c0_7] : memref<128x128xbf16, #tpu.memory_space<vmem>>, vector<128x128xbf16>
    %cst_8 = arith.constant dense<0.000000e+00> : vector<2x128xf32>
    %10 = tpu.matmul %8, %9, %cst_8 {dimension_numbers = #tpu.dot_dimension_numbers<[1], [0], [0], [1], [0, 0, 1, 1], [], []>} : vector<2x128xbf16>, vector<128x128xbf16>, vector<2x128xf32> -> vector<2x128xf32>
    %c0_9 = arith.constant 0 : index
    %c0_10 = arith.constant 0 : index
    %11 = vector.load %arg5[%c0_9, %c0_10] : memref<1x128xf32, #tpu.memory_space<vmem>>, vector<1x128xf32>
    %12 = vector.broadcast %11 : vector<1x128xf32> to vector<2x128xf32>
    %13 = arith.addf %10, %12 : vector<2x128xf32>
    %cst_11 = arith.constant 0.000000e+00 : f32
    %14 = vector.broadcast %cst_11 : f32 to vector<2x128xf32>
    %15 = arith.maximumf %13, %14 : vector<2x128xf32>
    %c0_12 = arith.constant 0 : index
    %c0_13 = arith.constant 0 : index
    %16 = vector.load %arg6[%c0_12, %c0_13] : memref<2x128xf32, #tpu.memory_space<vmem>>, vector<2x128xf32>
    tpu.vector_store %arg6[%c0_12, %c0_13], %15 {strides = array<i32>} : memref<2x128xf32, #tpu.memory_space<vmem>>, vector<2x128xf32>,
    return
  }
  func.func @transform_0(%arg0: i32) -> (i32, i32) {
    %c0_i32 = arith.constant 0 : i32
    %c0_i32_0 = arith.constant 0 : i32
    return %arg0, %c0_i32 : i32, i32
  }
  func.func @transform_1(%arg0: i32) -> (i32, i32) {
    %c0_i32 = arith.constant 0 : i32
    %c0_i32_0 = arith.constant 0 : i32
    %c0_i32_1 = arith.constant 0 : i32
    return %c0_i32, %c0_i32_0 : i32, i32
  }
  func.func @transform_2(%arg0: i32) -> (i32, i32) {
    %c0_i32 = arith.constant 0 : i32
    %c0_i32_0 = arith.constant 0 : i32
    %c0_i32_1 = arith.constant 0 : i32
    return %c0_i32, %c0_i32_0 : i32, i32
  }
  func.func @transform_3(%arg0: i32) -> (i32, i32) {
    %c0_i32 = arith.constant 0 : i32
    %c0_i32_0 = arith.constant 0 : i32
    %c0_i32_1 = arith.constant 0 : i32
    return %c0_i32, %c0_i32_0 : i32, i32
  }
  func.func @transform_4(%arg0: i32) -> (i32, i32) {
    %c0_i32 = arith.constant 0 : i32
    %c0_i32_0 = arith.constant 0 : i32
    %c0_i32_1 = arith.constant 0 : i32
    return %c0_i32, %c0_i32_0 : i32, i32
  }
  func.func @transform_5(%arg0: i32) -> (i32, i32) {
    %c0_i32 = arith.constant 0 : i32
    %c0_i32_0 = arith.constant 0 : i32
    return %arg0, %c0_i32 : i32, i32
  }
}

</mosaic_0001>

<llo_original>
// kernel: _lambda_.3
$region0: #{_lambda_.3}
  #allocation0 [shape = 'u32[]', space=smem, size = 0x4, offset = 0x4, fixed_abs, tag = 'smem constant byte address 0x4 - core index']
  #allocation1 [shape = 'u32[144,128]{1,0:T(1,128)}', space=vmem, size = 0x12000, scoped, tag = 'internal scratch']
  %s0 = inlined_call_operand.vmem [shape: bf16[128,192], index: 0, kind: input, shape index: {}]
  %s1 = inlined_call_operand.vmem [shape: bf16[192,128], index: 1, kind: input, shape index: {}]
  %s2 = inlined_call_operand.vmem [shape: f32[1,128], index: 2, kind: input, shape index: {}]
  %s3 = inlined_call_operand.vmem [shape: bf16[128,128], index: 3, kind: output, shape index: {}]
  %s4 = sld [smem:[#allocation0]]
  $region22: #{_lambda_.3} parent=0
    _
  %s6 = ssub.s32 1, %s4
  %s7 = scalar_select 0, %s6, %s4
  // Predicated region
  $region2: #{_lambda_.3} parent=0 // pred_check
    _
  $region3: #{_lambda_.3} parent=0 // pred_check_branch
    %9 = sbr.rel (0) target = $region5
  $region4: #{_lambda_.3} parent=0 // pred_region
    _
  $region5: #{_lambda_.3} parent=0 // pred_fallthru
    _
  // Predicated region
  $region6: #{_lambda_.3} parent=0 // pred_check
    _
  $region7: #{_lambda_.3} parent=0 // pred_check_branch
    %11 = sbr.rel (0) target = $region9
  $region8: #{_lambda_.3} parent=0 // pred_region
    _
  $region9: #{_lambda_.3} parent=0 // pred_fallthru
    _
  // Predicated region
  $region10: #{_lambda_.3} parent=0 // pred_check
    _
  $region11: #{_lambda_.3} parent=0 // pred_check_branch
    %13 = sbr.rel (0) target = $region13
  $region12: #{_lambda_.3} parent=0 // pred_region
    _
  $region13: #{_lambda_.3} parent=0 // pred_fallthru
    _
  %v15 = vld [vmem:[%s0] sm:$0xff]
  %v16 = vld [vmem:[%s0 + $0x8] sm:$0xff]
  %v17 = vld [vmem:[%s0 + $0x10] sm:$0xff]
  %v18 = vld [vmem:[%s0 + $0x18] sm:$0xff]
  %v19 = vld [vmem:[%s0 + $0x20] sm:$0xff]
  %v20 = vld [vmem:[%s0 + $0x28] sm:$0xff]
  %v21 = vld [vmem:[%s0 + $0x30] sm:$0xff]
  %v22 = vld [vmem:[%s0 + $0x38] sm:$0xff]
  %v23 = vld [vmem:[%s0 + $0x40] sm:$0xff]
  %v24 = vld [vmem:[%s0 + $0x48] sm:$0xff]
  %v25 = vld [vmem:[%s0 + $0x50] sm:$0xff]
  %v26 = vld [vmem:[%s0 + $0x58] sm:$0xff]
  %v27 = vld [vmem:[%s0 + $0x60] sm:$0xff]
  %v28 = vld [vmem:[%s0 + $0x68] sm:$0xff]
  %v29 = vld [vmem:[%s0 + $0x70] sm:$0xff]
  %v30 = vld [vmem:[%s0 + $0x78] sm:$0xff]
  %v31 = vld [vmem:[%s1] sm:$0xf]
  %v32 = vld [vmem:[%s1 + $0x4] sm:$0xf]
  %v33 = vld [vmem:[%s1 + $0x8] sm:$0xf]
  %v34 = vld [vmem:[%s1 + $0xc] sm:$0xf]
  %v35 = vld [vmem:[%s1 + $0x10] sm:$0xf]
  %v36 = vld [vmem:[%s1 + $0x14] sm:$0xf]
  %v37 = vld [vmem:[%s1 + $0x18] sm:$0xf]
  %v38 = vld [vmem:[%s1 + $0x1c] sm:$0xf]
  %v39 = vld [vmem:[%s1 + $0x20] sm:$0xf]
  %v40 = vld [vmem:[%s1 + $0x24] sm:$0xf]
  %v41 = vld [vmem:[%s1 + $0x28] sm:$0xf]
  %v42 = vld [vmem:[%s1 + $0x2c] sm:$0xf]
  %v43 = vld [vmem:[%s1 + $0x30] sm:$0xf]
  %v44 = vld [vmem:[%s1 + $0x34] sm:$0xf]
  %v45 = vld [vmem:[%s1 + $0x38] sm:$0xf]
  %v46 = vld [vmem:[%s1 + $0x3c] sm:$0xf]
  %v47 = vld [vmem:[%s1 + $0x40] sm:$0xf]
  %v48 = vld [vmem:[%s1 + $0x44] sm:$0xf]
  %v49 = vld [vmem:[%s1 + $0x48] sm:$0xf]
  %v50 = vld [vmem:[%s1 + $0x4c] sm:$0xf]
  %v51 = vld [vmem:[%s1 + $0x50] sm:$0xf]
  %v52 = vld [vmem:[%s1 + $0x54] sm:$0xf]
  %v53 = vld [vmem:[%s1 + $0x58] sm:$0xf]
  %v54 = vld [vmem:[%s1 + $0x5c] sm:$0xf]
  %v55 = vld [vmem:[%s2] sm:$0x1]
  %v57 = vlaneseq
  %v58 = vshrl.u32 %v57, 7
  %v59 = vsub.s32 0, %v58
  %v60 = vrot.slane %v55, %v59
  %v78 = vunpack.c.l.b16 %v15
  %v79 = vunpack.c.h.b16 %v15
  %v80 = vunpack.c.l.b16 %v16
  %v81 = vunpack.c.h.b16 %v16
  %v82 = vunpack.c.l.b16 %v17
  %v83 = vunpack.c.h.b16 %v17
  %v84 = vunpack.c.l.b16 %v18
  %v85 = vunpack.c.h.b16 %v18
  %v86 = vunpack.c.l.b16 %v19
  %v87 = vunpack.c.h.b16 %v19
  %v88 = vunpack.c.l.b16 %v20
  %v89 = vunpack.c.h.b16 %v20
  %v90 = vunpack.c.l.b16 %v21
  %v91 = vunpack.c.h.b16 %v21
  %v92 = vunpack.c.l.b16 %v22
  %v93 = vunpack.c.h.b16 %v22
  %v94 = vunpack.c.l.b16 %v23
  %v95 = vunpack.c.h.b16 %v23
  %v96 = vunpack.c.l.b16 %v24
  %v97 = vunpack.c.h.b16 %v24
  %v98 = vunpack.c.l.b16 %v25
  %v99 = vunpack.c.h.b16 %v25
  %v100 = vunpack.c.l.b16 %v26
  %v101 = vunpack.c.h.b16 %v26
  %v102 = vunpack.c.l.b16 %v27
  %v103 = vunpack.c.h.b16 %v27
  %v104 = vunpack.c.l.b16 %v28
  %v105 = vunpack.c.h.b16 %v28
  %v106 = vunpack.c.l.b16 %v29
  %v107 = vunpack.c.h.b16 %v29
  %v108 = vunpack.c.l.b16 %v30
  %v109 = vunpack.c.h.b16 %v30
  %v110 = vpack.c.b16 %v80, %v78
  %v111 = vpack.c.b16 %v81, %v79
  %v112 = vpack.c.b16 %v84, %v82
  %v113 = vpack.c.b16 %v85, %v83
  %v114 = vpack.c.b16 %v88, %v86
  %v115 = vpack.c.b16 %v89, %v87
  %v116 = vpack.c.b16 %v92, %v90
  %v117 = vpack.c.b16 %v93, %v91
  %v118 = vpack.c.b16 %v96, %v94
  %v119 = vpack.c.b16 %v97, %v95
  %v120 = vpack.c.b16 %v100, %v98
  %v121 = vpack.c.b16 %v101, %v99
  %v122 = vpack.c.b16 %v104, %v102
  %v123 = vpack.c.b16 %v105, %v103
  %v124 = vpack.c.b16 %v108, %v106
  %v125 = vpack.c.b16 %v109, %v107
  %v158 = vunpack.c.l.b16 %v31
  %v159 = vunpack.c.l.b16 %v32
  %v160 = vunpack.c.l.b16 %v33
  %v161 = vunpack.c.l.b16 %v34
  %v162 = vunpack.c.l.b16 %v35
  %v163 = vunpack.c.l.b16 %v36
  %v164 = vunpack.c.l.b16 %v37
  %v165 = vunpack.c.l.b16 %v38
  %v166 = vunpack.c.l.b16 %v39
  %v167 = vunpack.c.l.b16 %v40
  %v168 = vunpack.c.l.b16 %v41
  %v169 = vunpack.c.l.b16 %v42
  %v170 = vunpack.c.l.b16 %v43
  %v171 = vunpack.c.l.b16 %v44
  %v172 = vunpack.c.l.b16 %v45
  %v173 = vunpack.c.l.b16 %v46
  %v174 = vunpack.c.l.b16 %v47
  %v175 = vunpack.c.l.b16 %v48
  %v176 = vunpack.c.l.b16 %v49
  %v177 = vunpack.c.l.b16 %v50
  %v178 = vunpack.c.l.b16 %v51
  %v179 = vunpack.c.l.b16 %v52
  %v180 = vunpack.c.l.b16 %v53
  %v181 = vunpack.c.l.b16 %v54
  %v182 = vpack.c.b16 %v159, %v158
  %v183 = vpack.c.b16 %v161, %v160
  %v184 = vpack.c.b16 %v163, %v162
  %v185 = vpack.c.b16 %v165, %v164
  %v186 = vpack.c.b16 %v167, %v166
  %v187 = vpack.c.b16 %v169, %v168
  %v188 = vpack.c.b16 %v171, %v170
  %v189 = vpack.c.b16 %v173, %v172
  %v190 = vpack.c.b16 %v175, %v174
  %v191 = vpack.c.b16 %v177, %v176
  %v192 = vpack.c.b16 %v179, %v178
  %v193 = vpack.c.b16 %v181, %v180
  %vm206 = vcmask 523264
  %v208 = vsel %vm206, %v111, 0
  %v211 = vsel %vm206, %v113, 0
  %v214 = vsel %vm206, %v115, 0
  %v217 = vsel %vm206, %v117, 0
  %v220 = vsel %vm206, %v119, 0
  %v223 = vsel %vm206, %v121, 0
  %v226 = vsel %vm206, %v123, 0
  %v229 = vsel %vm206, %v125, 0
  %231 = vmatprep.subr.bf16.mxu0 0
  %232 = vmatpush1.bf16.msra.mxu0 %v182
  %233 = vmatprep.subr.bf16.mxu0 0
  %234 = vmatpush1.bf16.msra.mxu0 %v183
  %235 = vmatprep.subr.bf16.mxu0 0
  %236 = vmatpush1.bf16.msra.mxu0 %v184
  %237 = vmatprep.subr.bf16.mxu0 0
  %238 = vmatpush1.bf16.msra.mxu0 %v185
  %239 = vmatprep.subr.bf16.mxu0 0
  %240 = vmatpush1.bf16.msra.mxu0 %v186
  %241 = vmatprep.subr.bf16.mxu0 0
  %242 = vmatpush1.bf16.msra.mxu0 %v187
  %243 = vmatprep.subr.bf16.mxu0 0
  %244 = vmatpush1.bf16.msra.mxu0 %v188
  %245 = vmatprep.subr.bf16.mxu0 0
  %246 = vmatpush1.bf16.msra.mxu0 %v189
  %247 = vmatprep.subr.bf16.mxu0 0
  %248 = vmatpush1.bf16.msra.mxu0 %v190
  %249 = vmatprep.subr.bf16.mxu0 0
  %250 = vmatpush1.bf16.msra.mxu0 %v191
  %251 = vmatprep.subr.bf16.mxu0 0
  %252 = vmatpush1.bf16.msra.mxu0 %v192
  %253 = vmatprep.subr.bf16.mxu0 0
  %254 = vmatpush1.bf16.msra.mxu0 %v193
  %255 = vmatprep.subr.bf16.mxu0 0
  %256 = vmatpush1.bf16.msra.mxu0 0
  %257 = vmatprep.subr.bf16.mxu0 0
  %258 = vmatpush1.bf16.msra.mxu0 0
  %259 = vmatprep.subr.bf16.mxu0 0
  %260 = vmatpush1.bf16.msra.mxu0 0
  %261 = vmatprep.subr.bf16.mxu0 0
  %262 = vmatpush1.bf16.msra.mxu0 0
  %263 = vmatprep.mubr.bf16.mxu0 %v208
  %264 = vmatmul.mubr.bf16.gmra.mrb[0].mxu0 %v110
  %v265 = vpop.f32.mrb[0].mxu0
  %v266 = vadd.f32 %v60, %v265
  %v267 = vpop.f32.mrb[0].mxu0
  %v268 = vpop.f32.mrb[0].mxu0
  %v269 = vadd.f32 %v60, %v268
  %v270 = vpop.f32.mrb[0].mxu0
  %271 = vmatprep.mubr.bf16.mxu0 %v211
  %272 = vmatmul.mubr.bf16.gmra.mrb[0].mxu0 %v112
  %v273 = vpop.f32.mrb[0].mxu0
  %v274 = vadd.f32 %v60, %v273
  %v275 = vpop.f32.mrb[0].mxu0
  %v276 = vpop.f32.mrb[0].mxu0
  %v277 = vadd.f32 %v60, %v276
  %v278 = vpop.f32.mrb[0].mxu0
  %279 = vmatprep.mubr.bf16.mxu0 %v214
  %280 = vmatmul.mubr.bf16.gmra.mrb[0].mxu0 %v114
  %v281 = vpop.f32.mrb[0].mxu0
  %v282 = vadd.f32 %v60, %v281
  %v283 = vpop.f32.mrb[0].mxu0
  %v284 = vpop.f32.mrb[0].mxu0
  %v285 = vadd.f32 %v60, %v284
  %v286 = vpop.f32.mrb[0].mxu0
  %287 = vmatprep.mubr.bf16.mxu0 %v217
  %288 = vmatmul.mubr.bf16.gmra.mrb[0].mxu0 %v116
  %v289 = vpop.f32.mrb[0].mxu0
  %v290 = vadd.f32 %v60, %v289
  %v291 = vpop.f32.mrb[0].mxu0
  %v292 = vpop.f32.mrb[0].mxu0
  %v293 = vadd.f32 %v60, %v292
  %v294 = vpop.f32.mrb[0].mxu0
  %295 = vmatprep.mubr.bf16.mxu0 %v220
  %296 = vmatmul.mubr.bf16.gmra.mrb[0].mxu0 %v118
  %v297 = vpop.f32.mrb[0].mxu0
  %v298 = vadd.f32 %v60, %v297
  %v299 = vpop.f32.mrb[0].mxu0
  %v300 = vpop.f32.mrb[0].mxu0
  %v301 = vadd.f32 %v60, %v300
  %v302 = vpop.f32.mrb[0].mxu0
  %303 = vmatprep.mubr.bf16.mxu0 %v223
  %304 = vmatmul.mubr.bf16.gmra.mrb[0].mxu0 %v120
  %v305 = vpop.f32.mrb[0].mxu0
  %v306 = vadd.f32 %v60, %v305
  %v307 = vpop.f32.mrb[0].mxu0
  %v308 = vpop.f32.mrb[0].mxu0
  %v309 = vadd.f32 %v60, %v308
  %v310 = vpop.f32.mrb[0].mxu0
  %311 = vmatprep.mubr.bf16.mxu0 %v226
  %312 = vmatmul.mubr.bf16.gmra.mrb[0].mxu0 %v122
  %v313 = vpop.f32.mrb[0].mxu0
  %v314 = vadd.f32 %v60, %v313
  %v315 = vpop.f32.mrb[0].mxu0
  %v316 = vpop.f32.mrb[0].mxu0
  %v317 = vadd.f32 %v60, %v316
  %v318 = vpop.f32.mrb[0].mxu0
  %319 = vmatprep.mubr.bf16.mxu0 %v229
  %320 = vmatmul.mubr.bf16.gmra.mrb[0].mxu0 %v124
  %v321 = vpop.f32.mrb[0].mxu0
  %v322 = vadd.f32 %v60, %v321
  %v323 = vpop.f32.mrb[0].mxu0
  %v324 = vpop.f32.mrb[0].mxu0
  %v325 = vadd.f32 %v60, %v324
  %v326 = vpop.f32.mrb[0].mxu0
  %327 = vdwg.mxu0
  %v328 = vmax.f32 %v266, 0.0
  %v329 = vmax.f32 %v269, 0.0
  %v330 = vmax.f32 %v274, 0.0
  %v331 = vmax.f32 %v277, 0.0
  %v332 = vmax.f32 %v282, 0.0
  %v333 = vmax.f32 %v285, 0.0
  %v334 = vmax.f32 %v290, 0.0
  %v335 = vmax.f32 %v293, 0.0
  %v336 = vmax.f32 %v298, 0.0
  %v337 = vmax.f32 %v301, 0.0
  %v338 = vmax.f32 %v306, 0.0
  %v339 = vmax.f32 %v309, 0.0
  %v340 = vmax.f32 %v314, 0.0
  %v341 = vmax.f32 %v317, 0.0
  %v342 = vmax.f32 %v322, 0.0
  %v343 = vmax.f32 %v325, 0.0
  %v344 = vpack.c.bf16 %v329, %v328
  %v345 = vpack.c.bf16 %v331, %v330
  %v346 = vpack.c.bf16 %v333, %v332
  %v347 = vpack.c.bf16 %v335, %v334
  %v348 = vpack.c.bf16 %v337, %v336
  %v349 = vpack.c.bf16 %v339, %v338
  %v350 = vpack.c.bf16 %v341, %v340
  %v351 = vpack.c.bf16 %v343, %v342
  %v360 = vunpack.c.l.b16 %v344
  %v361 = vunpack.c.h.b16 %v344
  %v362 = vunpack.c.l.b16 %v345
  %v363 = vunpack.c.h.b16 %v345
  %v364 = vunpack.c.l.b16 %v346
  %v365 = vunpack.c.h.b16 %v346
  %v366 = vunpack.c.l.b16 %v347
  %v367 = vunpack.c.h.b16 %v347
  %v368 = vunpack.c.l.b16 %v348
  %v369 = vunpack.c.h.b16 %v348
  %v370 = vunpack.c.l.b16 %v349
  %v371 = vunpack.c.h.b16 %v349
  %v372 = vunpack.c.l.b16 %v350
  %v373 = vunpack.c.h.b16 %v350
  %v374 = vunpack.c.l.b16 %v351
  %v375 = vunpack.c.h.b16 %v351
  %v376 = vpack.c.b16 %v360, %v360
  %v377 = vpack.c.b16 %v361, %v361
  %v378 = vpack.c.b16 %v362, %v362
  %v379 = vpack.c.b16 %v363, %v363
  %v380 = vpack.c.b16 %v364, %v364
  %v381 = vpack.c.b16 %v365, %v365
  %v382 = vpack.c.b16 %v366, %v366
  %v383 = vpack.c.b16 %v367, %v367
  %v384 = vpack.c.b16 %v368, %v368
  %v385 = vpack.c.b16 %v369, %v369
  %v386 = vpack.c.b16 %v370, %v370
  %v387 = vpack.c.b16 %v371, %v371
  %v388 = vpack.c.b16 %v372, %v372
  %v389 = vpack.c.b16 %v373, %v373
  %v390 = vpack.c.b16 %v374, %v374
  %v391 = vpack.c.b16 %v375, %v375
  %408 = vst [vmem:[%s3] sm:$0xf] %v376
  %409 = vst [vmem:[%s3 + $0x4] sm:$0xf] %v377
  %410 = vst [vmem:[%s3 + $0x8] sm:$0xf] %v378
  %411 = vst [vmem:[%s3 + $0xc] sm:$0xf] %v379
  %412 = vst [vmem:[%s3 + $0x10] sm:$0xf] %v380
  %413 = vst [vmem:[%s3 + $0x14] sm:$0xf] %v381
  %414 = vst [vmem:[%s3 + $0x18] sm:$0xf] %v382
  %415 = vst [vmem:[%s3 + $0x1c] sm:$0xf] %v383
  %416 = vst [vmem:[%s3 + $0x20] sm:$0xf] %v384
  %417 = vst [vmem:[%s3 + $0x24] sm:$0xf] %v385
  %418 = vst [vmem:[%s3 + $0x28] sm:$0xf] %v386
  %419 = vst [vmem:[%s3 + $0x2c] sm:$0xf] %v387
  %420 = vst [vmem:[%s3 + $0x30] sm:$0xf] %v388
  %421 = vst [vmem:[%s3 + $0x34] sm:$0xf] %v389
  %422 = vst [vmem:[%s3 + $0x38] sm:$0xf] %v390
  %423 = vst [vmem:[%s3 + $0x3c] sm:$0xf] %v391
  // Predicated region
  $region14: #{_lambda_.3} parent=0 // pred_check
    _
  $region15: #{_lambda_.3} parent=0 // pred_check_branch
    %425 = sbr.rel (0) target = $region17
  $region16: #{_lambda_.3} parent=0 // pred_region
    _
  $region17: #{_lambda_.3} parent=0 // pred_fallthru
    _
  // Predicated region
  $region18: #{_lambda_.3} parent=0 // pred_check
    _
  $region19: #{_lambda_.3} parent=0 // pred_check_branch
    %427 = sbr.rel (0) target = $region21
  $region20: #{_lambda_.3} parent=0 // pred_region
    _
  $region21: #{_lambda_.3} parent=0 // pred_fallthru
    _

// kernel: _lambda_.5
$region0: #{_lambda_.5}
  #allocation0 [shape = 'u32[]', space=smem, size = 0x4, offset = 0x4, fixed_abs, tag = 'smem constant byte address 0x4 - core index']
  #allocation1 [shape = 'u32[144,128]{1,0:T(1,128)}', space=vmem, size = 0x12000, scoped, tag = 'internal scratch']
  %s0 = inlined_call_operand.vmem [shape: bf16[2,1152], index: 0, kind: input, shape index: {}]
  %s1 = inlined_call_operand.vmem [shape: bf16[1152,128], index: 1, kind: input, shape index: {}]
  %s2 = inlined_call_operand.vmem [shape: f32[1,128], index: 2, kind: input, shape index: {}]
  %s3 = inlined_call_operand.vmem [shape: bf16[128,128], index: 3, kind: input, shape index: {}]
  %s4 = inlined_call_operand.vmem [shape: f32[1,128], index: 4, kind: input, shape index: {}]
  %s5 = inlined_call_operand.hbm [shape: f32[2,128], index: 5, kind: output, shape index: {}]
  %s6 = sld [smem:[#allocation0]]
  $region30: #{_lambda_.5} parent=0
    _
  %s8 = ssub.s32 1, %s6
  %s9 = scalar_select 0, %s8, %s6
  $region1: #{_lambda_.5} parent=0
    #allocation2 [shape = 'u8[1024]{0}', space=vmem, size = 0x400, scoped, tag = 'output window, operand 0, single buffered']
    #allocation3 [shape = 's32[1]{0}', space=sflag, size = 0x4, scoped, tag = 'scoped memory for _lambda_.5']
    %10 = vsyncpa [#allocation3], 0
    // Predicated region
    $region2: #{_lambda_.5} parent=1 // pred_check
      _
    $region3: #{_lambda_.5} parent=1 // pred_check_branch
      %12 = sbr.rel (0) target = $region5
    $region4: #{_lambda_.5} parent=1 // pred_region
      _
    $region5: #{_lambda_.5} parent=1 // pred_fallthru
      _
    // Predicated region
    $region6: #{_lambda_.5} parent=1 // pred_check
      _
    $region7: #{_lambda_.5} parent=1 // pred_check_branch
      %14 = sbr.rel (0) target = $region9
    $region8: #{_lambda_.5} parent=1 // pred_region
      _
    $region9: #{_lambda_.5} parent=1 // pred_fallthru
      _
    // Predicated region
    $region10: #{_lambda_.5} parent=1 // pred_check
      _
    $region11: #{_lambda_.5} parent=1 // pred_check_branch
      %16 = sbr.rel (0) target = $region13
    $region12: #{_lambda_.5} parent=1 // pred_region
      _
    $region13: #{_lambda_.5} parent=1 // pred_fallthru
      _
    // Predicated region
    $region14: #{_lambda_.5} parent=1 // pred_check
      _
    $region15: #{_lambda_.5} parent=1 // pred_check_branch
      %18 = sbr.rel (0) target = $region17
    $region16: #{_lambda_.5} parent=1 // pred_region
      _
    $region17: #{_lambda_.5} parent=1 // pred_fallthru
      _
    // Predicated region
    $region18: #{_lambda_.5} parent=1 // pred_check
      _
    $region19: #{_lambda_.5} parent=1 // pred_check_branch
      %20 = sbr.rel (0) target = $region21
    $region20: #{_lambda_.5} parent=1 // pred_region
      _
    $region21: #{_lambda_.5} parent=1 // pred_fallthru
      _
    %v22 = vld [vmem:[%s0] sm:$0xff]
    %v23 = vld [vmem:[%s0 + $0x8] sm:$0x1]
    %v24 = vld [vmem:[%s1] sm:$0xf]
    %v25 = vld [vmem:[%s1 + $0x4] sm:$0xf]
    %v26 = vld [vmem:[%s1 + $0x8] sm:$0xf]
    %v27 = vld [vmem:[%s1 + $0xc] sm:$0xf]
    %v28 = vld [vmem:[%s1 + $0x10] sm:$0xf]
    %v29 = vld [vmem:[%s1 + $0x14] sm:$0xf]
    %v30 = vld [vmem:[%s1 + $0x18] sm:$0xf]
    %v31 = vld [vmem:[%s1 + $0x1c] sm:$0xf]
    %v32 = vld [vmem:[%s1 + $0x20] sm:$0xf]
    %v33 = vld [vmem:[%s1 + $0x24] sm:$0xf]
    %v34 = vld [vmem:[%s1 + $0x28] sm:$0xf]
    %v35 = vld [vmem:[%s1 + $0x2c] sm:$0xf]
    %v36 = vld [vmem:[%s1 + $0x30] sm:$0xf]
    %v37 = vld [vmem:[%s1 + $0x34] sm:$0xf]
    %v38 = vld [vmem:[%s1 + $0x38] sm:$0xf]
    %v39 = vld [vmem:[%s1 + $0x3c] sm:$0xf]
    %v40 = vld [vmem:[%s1 + $0x40] sm:$0xf]
    %v41 = vld [vmem:[%s1 + $0x44] sm:$0xf]
    %v42 = vld [vmem:[%s1 + $0x48] sm:$0xf]
    %v43 = vld [vmem:[%s1 + $0x4c] sm:$0xf]
    %v44 = vld [vmem:[%s1 + $0x50] sm:$0xf]
    %v45 = vld [vmem:[%s1 + $0x54] sm:$0xf]
    %v46 = vld [vmem:[%s1 + $0x58] sm:$0xf]
    %v47 = vld [vmem:[%s1 + $0x5c] sm:$0xf]
    %v48 = vld [vmem:[%s1 + $0x60] sm:$0xf]
    %v49 = vld [vmem:[%s1 + $0x64] sm:$0xf]
    %v50 = vld [vmem:[%s1 + $0x68] sm:$0xf]
    %v51 = vld [vmem:[%s1 + $0x6c] sm:$0xf]
    %v52 = vld [vmem:[%s1 + $0x70] sm:$0xf]
    %v53 = vld [vmem:[%s1 + $0x74] sm:$0xf]
    %v54 = vld [vmem:[%s1 + $0x78] sm:$0xf]
    %v55 = vld [vmem:[%s1 + $0x7c] sm:$0xf]
    %v56 = vld [vmem:[%s1 + $0x80] sm:$0xf]
    %v57 = vld [vmem:[%s1 + $0x84] sm:$0xf]
    %v58 = vld [vmem:[%s1 + $0x88] sm:$0xf]
    %v59 = vld [vmem:[%s1 + $0x8c] sm:$0xf]
    %v60 = vld [vmem:[%s1 + $0x90] sm:$0xf]
    %v61 = vld [vmem:[%s1 + $0x94] sm:$0xf]
    %v62 = vld [vmem:[%s1 + $0x98] sm:$0xf]
    %v63 = vld [vmem:[%s1 + $0x9c] sm:$0xf]
    %v64 = vld [vmem:[%s1 + $0xa0] sm:$0xf]
    %v65 = vld [vmem:[%s1 + $0xa4] sm:$0xf]
    %v66 = vld [vmem:[%s1 + $0xa8] sm:$0xf]
    %v67 = vld [vmem:[%s1 + $0xac] sm:$0xf]
    %v68 = vld [vmem:[%s1 + $0xb0] sm:$0xf]
    %v69 = vld [vmem:[%s1 + $0xb4] sm:$0xf]
    %v70 = vld [vmem:[%s1 + $0xb8] sm:$0xf]
    %v71 = vld [vmem:[%s1 + $0xbc] sm:$0xf]
    %v72 = vld [vmem:[%s1 + $0xc0] sm:$0xf]
    %v73 = vld [vmem:[%s1 + $0xc4] sm:$0xf]
    %v74 = vld [vmem:[%s1 + $0xc8] sm:$0xf]
    %v75 = vld [vmem:[%s1 + $0xcc] sm:$0xf]
    %v76 = vld [vmem:[%s1 + $0xd0] sm:$0xf]
    %v77 = vld [vmem:[%s1 + $0xd4] sm:$0xf]
    %v78 = vld [vmem:[%s1 + $0xd8] sm:$0xf]
    %v79 = vld [vmem:[%s1 + $0xdc] sm:$0xf]
    %v80 = vld [vmem:[%s1 + $0xe0] sm:$0xf]
    %v81 = vld [vmem:[%s1 + $0xe4] sm:$0xf]
    %v82 = vld [vmem:[%s1 + $0xe8] sm:$0xf]
    %v83 = vld [vmem:[%s1 + $0xec] sm:$0xf]
    %v84 = vld [vmem:[%s1 + $0xf0] sm:$0xf]
    %v85 = vld [vmem:[%s1 + $0xf4] sm:$0xf]
    %v86 = vld [vmem:[%s1 + $0xf8] sm:$0xf]
    %v87 = vld [vmem:[%s1 + $0xfc] sm:$0xf]
    %v88 = vld [vmem:[%s1 + $0x100] sm:$0xf]
    %v89 = vld [vmem:[%s1 + $0x104] sm:$0xf]
    %v90 = vld [vmem:[%s1 + $0x108] sm:$0xf]
    %v91 = vld [vmem:[%s1 + $0x10c] sm:$0xf]
    %v92 = vld [vmem:[%s1 + $0x110] sm:$0xf]
    %v93 = vld [vmem:[%s1 + $0x114] sm:$0xf]
    %v94 = vld [vmem:[%s1 + $0x118] sm:$0xf]
    %v95 = vld [vmem:[%s1 + $0x11c] sm:$0xf]
    %v96 = vld [vmem:[%s1 + $0x120] sm:$0xf]
    %v97 = vld [vmem:[%s1 + $0x124] sm:$0xf]
    %v98 = vld [vmem:[%s1 + $0x128] sm:$0xf]
    %v99 = vld [vmem:[%s1 + $0x12c] sm:$0xf]
    %v100 = vld [vmem:[%s1 + $0x130] sm:$0xf]
    %v101 = vld [vmem:[%s1 + $0x134] sm:$0xf]
    %v102 = vld [vmem:[%s1 + $0x138] sm:$0xf]
    %v103 = vld [vmem:[%s1 + $0x13c] sm:$0xf]
    %v104 = vld [vmem:[%s1 + $0x140] sm:$0xf]
    %v105 = vld [vmem:[%s1 + $0x144] sm:$0xf]
    %v106 = vld [vmem:[%s1 + $0x148] sm:$0xf]
    %v107 = vld [vmem:[%s1 + $0x14c] sm:$0xf]
    %v108 = vld [vmem:[%s1 + $0x150] sm:$0xf]
    %v109 = vld [vmem:[%s1 + $0x154] sm:$0xf]
    %v110 = vld [vmem:[%s1 + $0x158] sm:$0xf]
    %v111 = vld [vmem:[%s1 + $0x15c] sm:$0xf]
    %v112 = vld [vmem:[%s1 + $0x160] sm:$0xf]
    %v113 = vld [vmem:[%s1 + $0x164] sm:$0xf]
    %v114 = vld [vmem:[%s1 + $0x168] sm:$0xf]
    %v115 = vld [vmem:[%s1 + $0x16c] sm:$0xf]
    %v116 = vld [vmem:[%s1 + $0x170] sm:$0xf]
    %v117 = vld [vmem:[%s1 + $0x174] sm:$0xf]
    %v118 = vld [vmem:[%s1 + $0x178] sm:$0xf]
    %v119 = vld [vmem:[%s1 + $0x17c] sm:$0xf]
    %v120 = vld [vmem:[%s1 + $0x180] sm:$0xf]
    %v121 = vld [vmem:[%s1 + $0x184] sm:$0xf]
    %v122 = vld [vmem:[%s1 + $0x188] sm:$0xf]
    %v123 = vld [vmem:[%s1 + $0x18c] sm:$0xf]
    %v124 = vld [vmem:[%s1 + $0x190] sm:$0xf]
    %v125 = vld [vmem:[%s1 + $0x194] sm:$0xf]
    %v126 = vld [vmem:[%s1 + $0x198] sm:$0xf]
    %v127 = vld [vmem:[%s1 + $0x19c] sm:$0xf]
    %v128 = vld [vmem:[%s1 + $0x1a0] sm:$0xf]
    %v129 = vld [vmem:[%s1 + $0x1a4] sm:$0xf]
    %v130 = vld [vmem:[%s1 + $0x1a8] sm:$0xf]
    %v131 = vld [vmem:[%s1 + $0x1ac] sm:$0xf]
    %v132 = vld [vmem:[%s1 + $0x1b0] sm:$0xf]
    %v133 = vld [vmem:[%s1 + $0x1b4] sm:$0xf]
    %v134 = vld [vmem:[%s1 + $0x1b8] sm:$0xf]
    %v135 = vld [vmem:[%s1 + $0x1bc] sm:$0xf]
    %v136 = vld [vmem:[%s1 + $0x1c0] sm:$0xf]
    %v137 = vld [vmem:[%s1 + $0x1c4] sm:$0xf]
    %v138 = vld [vmem:[%s1 + $0x1c8] sm:$0xf]
    %v139 = vld [vmem:[%s1 + $0x1cc] sm:$0xf]
    %v140 = vld [vmem:[%s1 + $0x1d0] sm:$0xf]
    %v141 = vld [vmem:[%s1 + $0x1d4] sm:$0xf]
    %v142 = vld [vmem:[%s1 + $0x1d8] sm:$0xf]
    %v143 = vld [vmem:[%s1 + $0x1dc] sm:$0xf]
    %v144 = vld [vmem:[%s1 + $0x1e0] sm:$0xf]
    %v145 = vld [vmem:[%s1 + $0x1e4] sm:$0xf]
    %v146 = vld [vmem:[%s1 + $0x1e8] sm:$0xf]
    %v147 = vld [vmem:[%s1 + $0x1ec] sm:$0xf]
    %v148 = vld [vmem:[%s1 + $0x1f0] sm:$0xf]
    %v149 = vld [vmem:[%s1 + $0x1f4] sm:$0xf]
    %v150 = vld [vmem:[%s1 + $0x1f8] sm:$0xf]
    %v151 = vld [vmem:[%s1 + $0x1fc] sm:$0xf]
    %v152 = vld [vmem:[%s1 + $0x200] sm:$0xf]
    %v153 = vld [vmem:[%s1 + $0x204] sm:$0xf]
    %v154 = vld [vmem:[%s1 + $0x208] sm:$0xf]
    %v155 = vld [vmem:[%s1 + $0x20c] sm:$0xf]
    %v156 = vld [vmem:[%s1 + $0x210] sm:$0xf]
    %v157 = vld [vmem:[%s1 + $0x214] sm:$0xf]
    %v158 = vld [vmem:[%s1 + $0x218] sm:$0xf]
    %v159 = vld [vmem:[%s1 + $0x21c] sm:$0xf]
    %v160 = vld [vmem:[%s1 + $0x220] sm:$0xf]
    %v161 = vld [vmem:[%s1 + $0x224] sm:$0xf]
    %v162 = vld [vmem:[%s1 + $0x228] sm:$0xf]
    %v163 = vld [vmem:[%s1 + $0x22c] sm:$0xf]
    %v164 = vld [vmem:[%s1 + $0x230] sm:$0xf]
    %v165 = vld [vmem:[%s1 + $0x234] sm:$0xf]
    %v166 = vld [vmem:[%s1 + $0x238] sm:$0xf]
    %v167 = vld [vmem:[%s1 + $0x23c] sm:$0xf]
    %v168 = vld [vmem:[%s2] sm:$0x1]
    %v170 = vlaneseq
    %v171 = vshrl.u32 %v170, 7
    %v172 = vsub.s32 0, %v171
    %v173 = vrot.slane %v168, %v172
    %v177 = vcombine.high %v22, %v22
    %v179 = vunpack.c.l.s4 1966171168
    %v180 = vunpack.c.0.s8 %v179
    %v181 = vlaneseq
    %v182 = vshrl.u32 %v181, 7
    %v183 = vsub.s32 %v180, %v182
    %v184 = vrot.slane %v22, %v183
    %v186 = vunpack.c.l.s4 1966171168
    %v187 = vunpack.c.0.s8 %v186
    %v188 = vlaneseq
    %v189 = vshrl.u32 %v188, 7
    %v190 = vsub.s32 %v187, %v189
    %v191 = vrot.slane %v177, %v190
    %v192 = vcombine.high %v184, %v184
    %v193 = vcombine.high %v191, %v191
    %v195 = vunpack.c.l.s4 1966171168
    %v196 = vunpack.c.0.s8 %v195
    %v197 = vlaneseq
    %v198 = vshrl.u32 %v197, 7
    %v199 = vsub.s32 %v196, %v198
    %v200 = vrot.slane %v184, %v199
    %v202 = vunpack.c.l.s4 1966171168
    %v203 = vunpack.c.0.s8 %v202
    %v204 = vlaneseq
    %v205 = vshrl.u32 %v204, 7
    %v206 = vsub.s32 %v203, %v205
    %v207 = vrot.slane %v191, %v206
    %v209 = vunpack.c.l.s4 1966171168
    %v210 = vunpack.c.0.s8 %v209
    %v211 = vlaneseq
    %v212 = vshrl.u32 %v211, 7
    %v213 = vsub.s32 %v210, %v212
    %v214 = vrot.slane %v192, %v213
    %v216 = vunpack.c.l.s4 1966171168
    %v217 = vunpack.c.0.s8 %v216
    %v218 = vlaneseq
    %v219 = vshrl.u32 %v218, 7
    %v220 = vsub.s32 %v217, %v219
    %v221 = vrot.slane %v193, %v220
    %v222 = vcombine.high %v200, %v200
    %v223 = vcombine.high %v207, %v207
    %v224 = vcombine.high %v214, %v214
    %v225 = vcombine.high %v221, %v221
    %v227 = vunpack.c.l.s4 1966171168
    %v228 = vunpack.c.0.s8 %v227
    %v229 = vlaneseq
    %v230 = vshrl.u32 %v229, 7
    %v231 = vsub.s32 %v228, %v230
    %v232 = vrot.slane %v23, %v231
    %v234 = vunpack.c.l.s4 1966171168
    %v235 = vunpack.c.0.s8 %v234
    %v236 = vlaneseq
    %v237 = vshrl.u32 %v236, 7
    %v238 = vsub.s32 %v235, %v237
    %v239 = vrot.slane %v232, %v238
    %v393 = vunpack.c.l.b16 %v24
    %v394 = vunpack.c.l.b16 %v25
    %v395 = vunpack.c.l.b16 %v26
    %v396 = vunpack.c.l.b16 %v27
    %v397 = vunpack.c.l.b16 %v28
    %v398 = vunpack.c.l.b16 %v29
    %v399 = vunpack.c.l.b16 %v30
    %v400 = vunpack.c.l.b16 %v31
    %v401 = vunpack.c.l.b16 %v32
    %v402 = vunpack.c.l.b16 %v33
    %v403 = vunpack.c.l.b16 %v34
    %v404 = vunpack.c.l.b16 %v35
    %v405 = vunpack.c.l.b16 %v36
    %v406 = vunpack.c.l.b16 %v37
    %v407 = vunpack.c.l.b16 %v38
    %v408 = vunpack.c.l.b16 %v39
    %v409 = vunpack.c.l.b16 %v40
    %v410 = vunpack.c.l.b16 %v41
    %v411 = vunpack.c.l.b16 %v42
    %v412 = vunpack.c.l.b16 %v43
    %v413 = vunpack.c.l.b16 %v44
    %v414 = vunpack.c.l.b16 %v45
    %v415 = vunpack.c.l.b16 %v46
    %v416 = vunpack.c.l.b16 %v47
    %v417 = vunpack.c.l.b16 %v48
    %v418 = vunpack.c.l.b16 %v49
    %v419 = vunpack.c.l.b16 %v50
    %v420 = vunpack.c.l.b16 %v51
    %v421 = vunpack.c.l.b16 %v52
    %v422 = vunpack.c.l.b16 %v53
    %v423 = vunpack.c.l.b16 %v54
    %v424 = vunpack.c.l.b16 %v55
    %v425 = vunpack.c.l.b16 %v56
    %v426 = vunpack.c.l.b16 %v57
    %v427 = vunpack.c.l.b16 %v58
    %v428 = vunpack.c.l.b16 %v59
    %v429 = vunpack.c.l.b16 %v60
    %v430 = vunpack.c.l.b16 %v61
    %v431 = vunpack.c.l.b16 %v62
    %v432 = vunpack.c.l.b16 %v63
    %v433 = vunpack.c.l.b16 %v64
    %v434 = vunpack.c.l.b16 %v65
    %v435 = vunpack.c.l.b16 %v66
    %v436 = vunpack.c.l.b16 %v67
    %v437 = vunpack.c.l.b16 %v68
    %v438 = vunpack.c.l.b16 %v69
    %v439 = vunpack.c.l.b16 %v70
    %v440 = vunpack.c.l.b16 %v71
    %v441 = vunpack.c.l.b16 %v72
    %v442 = vunpack.c.l.b16 %v73
    %v443 = vunpack.c.l.b16 %v74
    %v444 = vunpack.c.l.b16 %v75
    %v445 = vunpack.c.l.b16 %v76
    %v446 = vunpack.c.l.b16 %v77
    %v447 = vunpack.c.l.b16 %v78
    %v448 = vunpack.c.l.b16 %v79
    %v449 = vunpack.c.l.b16 %v80
    %v450 = vunpack.c.l.b16 %v81
    %v451 = vunpack.c.l.b16 %v82
    %v452 = vunpack.c.l.b16 %v83
    %v453 = vunpack.c.l.b16 %v84
    %v454 = vunpack.c.l.b16 %v85
    %v455 = vunpack.c.l.b16 %v86
    %v456 = vunpack.c.l.b16 %v87
    %v457 = vunpack.c.l.b16 %v88
    %v458 = vunpack.c.l.b16 %v89
    %v459 = vunpack.c.l.b16 %v90
    %v460 = vunpack.c.l.b16 %v91
    %v461 = vunpack.c.l.b16 %v92
    %v462 = vunpack.c.l.b16 %v93
    %v463 = vunpack.c.l.b16 %v94
    %v464 = vunpack.c.l.b16 %v95
    %v465 = vunpack.c.l.b16 %v96
    %v466 = vunpack.c.l.b16 %v97
    %v467 = vunpack.c.l.b16 %v98
    %v468 = vunpack.c.l.b16 %v99
    %v469 = vunpack.c.l.b16 %v100
    %v470 = vunpack.c.l.b16 %v101
    %v471 = vunpack.c.l.b16 %v102
    %v472 = vunpack.c.l.b16 %v103
    %v473 = vunpack.c.l.b16 %v104
    %v474 = vunpack.c.l.b16 %v105
    %v475 = vunpack.c.l.b16 %v106
    %v476 = vunpack.c.l.b16 %v107
    %v477 = vunpack.c.l.b16 %v108
    %v478 = vunpack.c.l.b16 %v109
    %v479 = vunpack.c.l.b16 %v110
    %v480 = vunpack.c.l.b16 %v111
    %v481 = vunpack.c.l.b16 %v112
    %v482 = vunpack.c.l.b16 %v113
    %v483 = vunpack.c.l.b16 %v114
    %v484 = vunpack.c.l.b16 %v115
    %v485 = vunpack.c.l.b16 %v116
    %v486 = vunpack.c.l.b16 %v117
    %v487 = vunpack.c.l.b16 %v118
    %v488 = vunpack.c.l.b16 %v119
    %v489 = vunpack.c.l.b16 %v120
    %v490 = vunpack.c.l.b16 %v121
    %v491 = vunpack.c.l.b16 %v122
    %v492 = vunpack.c.l.b16 %v123
    %v493 = vunpack.c.l.b16 %v124
    %v494 = vunpack.c.l.b16 %v125
    %v495 = vunpack.c.l.b16 %v126
    %v496 = vunpack.c.l.b16 %v127
    %v497 = vunpack.c.l.b16 %v128
    %v498 = vunpack.c.l.b16 %v129
    %v499 = vunpack.c.l.b16 %v130
    %v500 = vunpack.c.l.b16 %v131
    %v501 = vunpack.c.l.b16 %v132
    %v502 = vunpack.c.l.b16 %v133
    %v503 = vunpack.c.l.b16 %v134
    %v504 = vunpack.c.l.b16 %v135
    %v505 = vunpack.c.l.b16 %v136
    %v506 = vunpack.c.l.b16 %v137
    %v507 = vunpack.c.l.b16 %v138
    %v508 = vunpack.c.l.b16 %v139
    %v509 = vunpack.c.l.b16 %v140
    %v510 = vunpack.c.l.b16 %v141
    %v511 = vunpack.c.l.b16 %v142
    %v512 = vunpack.c.l.b16 %v143
    %v513 = vunpack.c.l.b16 %v144
    %v514 = vunpack.c.l.b16 %v145
    %v515 = vunpack.c.l.b16 %v146
    %v516 = vunpack.c.l.b16 %v147
    %v517 = vunpack.c.l.b16 %v148
    %v518 = vunpack.c.l.b16 %v149
    %v519 = vunpack.c.l.b16 %v150
    %v520 = vunpack.c.l.b16 %v151
    %v521 = vunpack.c.l.b16 %v152
    %v522 = vunpack.c.l.b16 %v153
    %v523 = vunpack.c.l.b16 %v154
    %v524 = vunpack.c.l.b16 %v155
    %v525 = vunpack.c.l.b16 %v156
    %v526 = vunpack.c.l.b16 %v157
    %v527 = vunpack.c.l.b16 %v158
    %v528 = vunpack.c.l.b16 %v159
    %v529 = vunpack.c.l.b16 %v160
    %v530 = vunpack.c.l.b16 %v161
    %v531 = vunpack.c.l.b16 %v162
    %v532 = vunpack.c.l.b16 %v163
    %v533 = vunpack.c.l.b16 %v164
    %v534 = vunpack.c.l.b16 %v165
    %v535 = vunpack.c.l.b16 %v166
    %v536 = vunpack.c.l.b16 %v167
    %v537 = vpack.c.b16 %v394, %v393
    %v538 = vpack.c.b16 %v396, %v395
    %v539 = vpack.c.b16 %v398, %v397
    %v540 = vpack.c.b16 %v400, %v399
    %v541 = vpack.c.b16 %v402, %v401
    %v542 = vpack.c.b16 %v404, %v403
    %v543 = vpack.c.b16 %v406, %v405
    %v544 = vpack.c.b16 %v408, %v407
    %v545 = vpack.c.b16 %v410, %v409
    %v546 = vpack.c.b16 %v412, %v411
    %v547 = vpack.c.b16 %v414, %v413
    %v548 = vpack.c.b16 %v416, %v415
    %v549 = vpack.c.b16 %v418, %v417
    %v550 = vpack.c.b16 %v420, %v419
    %v551 = vpack.c.b16 %v422, %v421
    %v552 = vpack.c.b16 %v424, %v423
    %v553 = vpack.c.b16 %v426, %v425
    %v554 = vpack.c.b16 %v428, %v427
    %v555 = vpack.c.b16 %v430, %v429
    %v556 = vpack.c.b16 %v432, %v431
    %v557 = vpack.c.b16 %v434, %v433
    %v558 = vpack.c.b16 %v436, %v435
    %v559 = vpack.c.b16 %v438, %v437
    %v560 = vpack.c.b16 %v440, %v439
    %v561 = vpack.c.b16 %v442, %v441
    %v562 = vpack.c.b16 %v444, %v443
    %v563 = vpack.c.b16 %v446, %v445
    %v564 = vpack.c.b16 %v448, %v447
    %v565 = vpack.c.b16 %v450, %v449
    %v566 = vpack.c.b16 %v452, %v451
    %v567 = vpack.c.b16 %v454, %v453
    %v568 = vpack.c.b16 %v456, %v455
    %v569 = vpack.c.b16 %v458, %v457
    %v570 = vpack.c.b16 %v460, %v459
    %v571 = vpack.c.b16 %v462, %v461
    %v572 = vpack.c.b16 %v464, %v463
    %v573 = vpack.c.b16 %v466, %v465
    %v574 = vpack.c.b16 %v468, %v467
    %v575 = vpack.c.b16 %v470, %v469
    %v576 = vpack.c.b16 %v472, %v471
    %v577 = vpack.c.b16 %v474, %v473
    %v578 = vpack.c.b16 %v476, %v475
    %v579 = vpack.c.b16 %v478, %v477
    %v580 = vpack.c.b16 %v480, %v479
    %v581 = vpack.c.b16 %v482, %v481
    %v582 = vpack.c.b16 %v484, %v483
    %v583 = vpack.c.b16 %v486, %v485
    %v584 = vpack.c.b16 %v488, %v487
    %v585 = vpack.c.b16 %v490, %v489
    %v586 = vpack.c.b16 %v492, %v491
    %v587 = vpack.c.b16 %v494, %v493
    %v588 = vpack.c.b16 %v496, %v495
    %v589 = vpack.c.b16 %v498, %v497
    %v590 = vpack.c.b16 %v500, %v499
    %v591 = vpack.c.b16 %v502, %v501
    %v592 = vpack.c.b16 %v504, %v503
    %v593 = vpack.c.b16 %v506, %v505
    %v594 = vpack.c.b16 %v508, %v507
    %v595 = vpack.c.b16 %v510, %v509
    %v596 = vpack.c.b16 %v512, %v511
    %v597 = vpack.c.b16 %v514, %v513
    %v598 = vpack.c.b16 %v516, %v515
    %v599 = vpack.c.b16 %v518, %v517
    %v600 = vpack.c.b16 %v520, %v519
    %v601 = vpack.c.b16 %v522, %v521
    %v602 = vpack.c.b16 %v524, %v523
    %v603 = vpack.c.b16 %v526, %v525
    %v604 = vpack.c.b16 %v528, %v527
    %v605 = vpack.c.b16 %v530, %v529
    %v606 = vpack.c.b16 %v532, %v531
    %v607 = vpack.c.b16 %v534, %v533
    %v608 = vpack.c.b16 %v536, %v535
    %681 = vmatprep.subr.bf16.mxu0 0
    %682 = vmatpush1.bf16.msra.mxu0 %v537
    %683 = vmatprep.subr.bf16.mxu0 0
    %684 = vmatpush1.bf16.msra.mxu0 %v538
    %685 = vmatprep.subr.bf16.mxu0 0
    %686 = vmatpush1.bf16.msra.mxu0 %v539
    %687 = vmatprep.subr.bf16.mxu0 0
    %688 = vmatpush1.bf16.msra.mxu0 %v540
    %689 = vmatprep.subr.bf16.mxu0 0
    %690 = vmatpush1.bf16.msra.mxu0 %v541
    %691 = vmatprep.subr.bf16.mxu0 0
    %692 = vmatpush1.bf16.msra.mxu0 %v542
    %693 = vmatprep.subr.bf16.mxu0 0
    %694 = vmatpush1.bf16.msra.mxu0 %v543
    %695 = vmatprep.subr.bf16.mxu0 0
    %696 = vmatpush1.bf16.msra.mxu0 %v544
    %697 = vmatprep.subr.bf16.mxu0 0
    %698 = vmatpush1.bf16.msra.mxu0 %v545
    %699 = vmatprep.subr.bf16.mxu0 0
    %700 = vmatpush1.bf16.msra.mxu0 %v546
    %701 = vmatprep.subr.bf16.mxu0 0
    %702 = vmatpush1.bf16.msra.mxu0 %v547
    %703 = vmatprep.subr.bf16.mxu0 0
    %704 = vmatpush1.bf16.msra.mxu0 %v548
    %705 = vmatprep.subr.bf16.mxu0 0
    %706 = vmatpush1.bf16.msra.mxu0 %v549
    %707 = vmatprep.subr.bf16.mxu0 0
    %708 = vmatpush1.bf16.msra.mxu0 %v550
    %709 = vmatprep.subr.bf16.mxu0 0
    %710 = vmatpush1.bf16.msra.mxu0 %v551
    %711 = vmatprep.subr.bf16.mxu0 0
    %712 = vmatpush1.bf16.msra.mxu0 %v552
    %713 = vmatprep.mubr.bf16.mxu0 %v214
    %714 = vmatmul.mubr.bf16.gmra.mrb[0].mxu0 %v200
    %v715 = vpop.f32.mrb[0].mxu0
    %v716 = vadd.f32 %v173, %v715
    %v717 = vpop.f32.mrb[0].mxu0
    %v718 = vpop.f32.mrb[0].mxu0
    %v719 = vpop.f32.mrb[0].mxu0
    %720 = vdwg.mxu0
    %721 = vmatprep.subr.bf16.mxu0 0
    %722 = vmatpush1.bf16.msra.mxu0 %v553
    %723 = vmatprep.subr.bf16.mxu0 0
    %724 = vmatpush1.bf16.msra.mxu0 %v554
    %725 = vmatprep.subr.bf16.mxu0 0
    %726 = vmatpush1.bf16.msra.mxu0 %v555
    %727 = vmatprep.subr.bf16.mxu0 0
    %728 = vmatpush1.bf16.msra.mxu0 %v556
    %729 = vmatprep.subr.bf16.mxu0 0
    %730 = vmatpush1.bf16.msra.mxu0 %v557
    %731 = vmatprep.subr.bf16.mxu0 0
    %732 = vmatpush1.bf16.msra.mxu0 %v558
    %733 = vmatprep.subr.bf16.mxu0 0
    %734 = vmatpush1.bf16.msra.mxu0 %v559
    %735 = vmatprep.subr.bf16.mxu0 0
    %736 = vmatpush1.bf16.msra.mxu0 %v560
    %737 = vmatprep.subr.bf16.mxu0 0
    %738 = vmatpush1.bf16.msra.mxu0 %v561
    %739 = vmatprep.subr.bf16.mxu0 0
    %740 = vmatpush1.bf16.msra.mxu0 %v562
    %741 = vmatprep.subr.bf16.mxu0 0
    %742 = vmatpush1.bf16.msra.mxu0 %v563
    %743 = vmatprep.subr.bf16.mxu0 0
    %744 = vmatpush1.bf16.msra.mxu0 %v564
    %745 = vmatprep.subr.bf16.mxu0 0
    %746 = vmatpush1.bf16.msra.mxu0 %v565
    %747 = vmatprep.subr.bf16.mxu0 0
    %748 = vmatpush1.bf16.msra.mxu0 %v566
    %749 = vmatprep.subr.bf16.mxu0 0
    %750 = vmatpush1.bf16.msra.mxu0 %v567
    %751 = vmatprep.subr.bf16.mxu0 0
    %752 = vmatpush1.bf16.msra.mxu0 %v568
    %753 = vmatprep.mubr.bf16.mxu0 %v224
    %754 = vmatmul.mubr.bf16.gmra.mrb[0].mxu0 %v222
    %v755 = vpop.f32.mrb[0].mxu0
    %v756 = vadd.f32 %v716, %v755
    %v757 = vpop.f32.mrb[0].mxu0
    %v758 = vpop.f32.mrb[0].mxu0
    %v759 = vpop.f32.mrb[0].mxu0
    %760 = vdwg.mxu0
    %761 = vmatprep.subr.bf16.mxu0 0
    %762 = vmatpush1.bf16.msra.mxu0 %v569
    %763 = vmatprep.subr.bf16.mxu0 0
    %764 = vmatpush1.bf16.msra.mxu0 %v570
    %765 = vmatprep.subr.bf16.mxu0 0
    %766 = vmatpush1.bf16.msra.mxu0 %v571
    %767 = vmatprep.subr.bf16.mxu0 0
    %768 = vmatpush1.bf16.msra.mxu0 %v572
    %769 = vmatprep.subr.bf16.mxu0 0
    %770 = vmatpush1.bf16.msra.mxu0 %v573
    %771 = vmatprep.subr.bf16.mxu0 0
    %772 = vmatpush1.bf16.msra.mxu0 %v574
    %773 = vmatprep.subr.bf16.mxu0 0
    %774 = vmatpush1.bf16.msra.mxu0 %v575
    %775 = vmatprep.subr.bf16.mxu0 0
    %776 = vmatpush1.bf16.msra.mxu0 %v576
    %777 = vmatprep.subr.bf16.mxu0 0
    %778 = vmatpush1.bf16.msra.mxu0 %v577
    %779 = vmatprep.subr.bf16.mxu0 0
    %780 = vmatpush1.bf16.msra.mxu0 %v578
    %781 = vmatprep.subr.bf16.mxu0 0
    %782 = vmatpush1.bf16.msra.mxu0 %v579
    %783 = vmatprep.subr.bf16.mxu0 0
    %784 = vmatpush1.bf16.msra.mxu0 %v580
    %785 = vmatprep.subr.bf16.mxu0 0
    %786 = vmatpush1.bf16.msra.mxu0 %v581
    %787 = vmatprep.subr.bf16.mxu0 0
    %788 = vmatpush1.bf16.msra.mxu0 %v582
    %789 = vmatprep.subr.bf16.mxu0 0
    %790 = vmatpush1.bf16.msra.mxu0 %v583
    %791 = vmatprep.subr.bf16.mxu0 0
    %792 = vmatpush1.bf16.msra.mxu0 %v584
    %793 = vmatprep.mubr.bf16.mxu0 %v221
    %794 = vmatmul.mubr.bf16.gmra.mrb[0].mxu0 %v207
    %v795 = vpop.f32.mrb[0].mxu0
    %v796 = vadd.f32 %v756, %v795
    %v797 = vpop.f32.mrb[0].mxu0
    %v798 = vpop.f32.mrb[0].mxu0
    %v799 = vpop.f32.mrb[0].mxu0
    %800 = vdwg.mxu0
    %801 = vmatprep.subr.bf16.mxu0 0
    %802 = vmatpush1.bf16.msra.mxu0 %v585
    %803 = vmatprep.subr.bf16.mxu0 0
    %804 = vmatpush1.bf16.msra.mxu0 %v586
    %805 = vmatprep.subr.bf16.mxu0 0
    %806 = vmatpush1.bf16.msra.mxu0 %v587
    %807 = vmatprep.subr.bf16.mxu0 0
    %808 = vmatpush1.bf16.msra.mxu0 %v588
    %809 = vmatprep.subr.bf16.mxu0 0
    %810 = vmatpush1.bf16.msra.mxu0 %v589
    %811 = vmatprep.subr.bf16.mxu0 0
    %812 = vmatpush1.bf16.msra.mxu0 %v590
    %813 = vmatprep.subr.bf16.mxu0 0
    %814 = vmatpush1.bf16.msra.mxu0 %v591
    %815 = vmatprep.subr.bf16.mxu0 0
    %816 = vmatpush1.bf16.msra.mxu0 %v592
    %817 = vmatprep.subr.bf16.mxu0 0
    %818 = vmatpush1.bf16.msra.mxu0 %v593
    %819 = vmatprep.subr.bf16.mxu0 0
    %820 = vmatpush1.bf16.msra.mxu0 %v594
    %821 = vmatprep.subr.bf16.mxu0 0
    %822 = vmatpush1.bf16.msra.mxu0 %v595
    %823 = vmatprep.subr.bf16.mxu0 0
    %824 = vmatpush1.bf16.msra.mxu0 %v596
    %825 = vmatprep.subr.bf16.mxu0 0
    %826 = vmatpush1.bf16.msra.mxu0 %v597
    %827 = vmatprep.subr.bf16.mxu0 0
    %828 = vmatpush1.bf16.msra.mxu0 %v598
    %829 = vmatprep.subr.bf16.mxu0 0
    %830 = vmatpush1.bf16.msra.mxu0 %v599
    %831 = vmatprep.subr.bf16.mxu0 0
    %832 = vmatpush1.bf16.msra.mxu0 %v600
    %833 = vmatprep.mubr.bf16.mxu0 %v225
    %834 = vmatmul.mubr.bf16.gmra.mrb[0].mxu0 %v223
    %v835 = vpop.f32.mrb[0].mxu0
    %v836 = vadd.f32 %v796, %v835
    %v837 = vpop.f32.mrb[0].mxu0
    %v838 = vpop.f32.mrb[0].mxu0
    %v839 = vpop.f32.mrb[0].mxu0
    %840 = vdwg.mxu0
    %841 = vmatprep.subr.bf16.mxu0 0
    %842 = vmatpush1.bf16.msra.mxu0 %v601
    %843 = vmatprep.subr.bf16.mxu0 0
    %844 = vmatpush1.bf16.msra.mxu0 %v602
    %845 = vmatprep.subr.bf16.mxu0 0
    %846 = vmatpush1.bf16.msra.mxu0 %v603
    %847 = vmatprep.subr.bf16.mxu0 0
    %848 = vmatpush1.bf16.msra.mxu0 %v604
    %849 = vmatprep.subr.bf16.mxu0 0
    %850 = vmatpush1.bf16.msra.mxu0 %v605
    %851 = vmatprep.subr.bf16.mxu0 0
    %852 = vmatpush1.bf16.msra.mxu0 %v606
    %853 = vmatprep.subr.bf16.mxu0 0
    %854 = vmatpush1.bf16.msra.mxu0 %v607
    %855 = vmatprep.subr.bf16.mxu0 0
    %856 = vmatpush1.bf16.msra.mxu0 %v608
    %857 = vmatprep.subr.bf16.mxu0 0
    %858 = vmatpush1.bf16.msra.mxu0 0
    %859 = vmatprep.subr.bf16.mxu0 0
    %860 = vmatpush1.bf16.msra.mxu0 0
    %861 = vmatprep.subr.bf16.mxu0 0
    %862 = vmatpush1.bf16.msra.mxu0 0
    %863 = vmatprep.subr.bf16.mxu0 0
    %864 = vmatpush1.bf16.msra.mxu0 0
    %865 = vmatprep.subr.bf16.mxu0 0
    %866 = vmatpush1.bf16.msra.mxu0 0
    %867 = vmatprep.subr.bf16.mxu0 0
    %868 = vmatpush1.bf16.msra.mxu0 0
    %869 = vmatprep.subr.bf16.mxu0 0
    %870 = vmatpush1.bf16.msra.mxu0 0
    %871 = vmatprep.subr.bf16.mxu0 0
    %872 = vmatpush1.bf16.msra.mxu0 0
    %873 = vmatprep.mubr.bf16.mxu0 0
    %874 = vmatmul.mubr.bf16.gmra.mrb[0].mxu0 %v239
    %v875 = vpop.f32.mrb[0].mxu0
    %v876 = vadd.f32 %v836, %v875
    %v877 = vpop.f32.mrb[0].mxu0
    %v878 = vpop.f32.mrb[0].mxu0
    %v879 = vpop.f32.mrb[0].mxu0
    %880 = vdwg.mxu0
    %v881 = vmax.f32 %v876, 0.0
    %v882 = vpack.c.bf16 %v881, %v881
    %v883 = vld [vmem:[%s3] sm:$0xf]
    %v884 = vld [vmem:[%s3 + $0x4] sm:$0xf]
    %v885 = vld [vmem:[%s3 + $0x8] sm:$0xf]
    %v886 = vld [vmem:[%s3 + $0xc] sm:$0xf]
    %v887 = vld [vmem:[%s3 + $0x10] sm:$0xf]
    %v888 = vld [vmem:[%s3 + $0x14] sm:$0xf]
    %v889 = vld [vmem:[%s3 + $0x18] sm:$0xf]
    %v890 = vld [vmem:[%s3 + $0x1c] sm:$0xf]
    %v891 = vld [vmem:[%s3 + $0x20] sm:$0xf]
    %v892 = vld [vmem:[%s3 + $0x24] sm:$0xf]
    %v893 = vld [vmem:[%s3 + $0x28] sm:$0xf]
    %v894 = vld [vmem:[%s3 + $0x2c] sm:$0xf]
    %v895 = vld [vmem:[%s3 + $0x30] sm:$0xf]
    %v896 = vld [vmem:[%s3 + $0x34] sm:$0xf]
    %v897 = vld [vmem:[%s3 + $0x38] sm:$0xf]
    %v898 = vld [vmem:[%s3 + $0x3c] sm:$0xf]
    %v899 = vld [vmem:[%s4] sm:$0x1]
    %v901 = vlaneseq
    %v902 = vshrl.u32 %v901, 7
    %v903 = vsub.s32 0, %v902
    %v904 = vrot.slane %v899, %v903
    %v922 = vunpack.c.l.b16 %v883
    %v923 = vunpack.c.l.b16 %v884
    %v924 = vunpack.c.l.b16 %v885
    %v925 = vunpack.c.l.b16 %v886
    %v926 = vunpack.c.l.b16 %v887
    %v927 = vunpack.c.l.b16 %v888
    %v928 = vunpack.c.l.b16 %v889
    %v929 = vunpack.c.l.b16 %v890
    %v930 = vunpack.c.l.b16 %v891
    %v931 = vunpack.c.l.b16 %v892
    %v932 = vunpack.c.l.b16 %v893
    %v933 = vunpack.c.l.b16 %v894
    %v934 = vunpack.c.l.b16 %v895
    %v935 = vunpack.c.l.b16 %v896
    %v936 = vunpack.c.l.b16 %v897
    %v937 = vunpack.c.l.b16 %v898
    %v938 = vpack.c.b16 %v923, %v922
    %v939 = vpack.c.b16 %v925, %v924
    %v940 = vpack.c.b16 %v927, %v926
    %v941 = vpack.c.b16 %v929, %v928
    %v942 = vpack.c.b16 %v931, %v930
    %v943 = vpack.c.b16 %v933, %v932
    %v944 = vpack.c.b16 %v935, %v934
    %v945 = vpack.c.b16 %v937, %v936
    %954 = vmatprep.subr.bf16.mxu0 0
    %955 = vmatpush1.bf16.msra.mxu0 %v938
    %956 = vmatprep.subr.bf16.mxu0 0
    %957 = vmatpush1.bf16.msra.mxu0 %v939
    %958 = vmatprep.subr.bf16.mxu0 0
    %959 = vmatpush1.bf16.msra.mxu0 %v940
    %960 = vmatprep.subr.bf16.mxu0 0
    %961 = vmatpush1.bf16.msra.mxu0 %v941
    %962 = vmatprep.subr.bf16.mxu0 0
    %963 = vmatpush1.bf16.msra.mxu0 %v942
    %964 = vmatprep.subr.bf16.mxu0 0
    %965 = vmatpush1.bf16.msra.mxu0 %v943
    %966 = vmatprep.subr.bf16.mxu0 0
    %967 = vmatpush1.bf16.msra.mxu0 %v944
    %968 = vmatprep.subr.bf16.mxu0 0
    %969 = vmatpush1.bf16.msra.mxu0 %v945
    %970 = vmatprep.subr.bf16.mxu0 0
    %971 = vmatpush1.bf16.msra.mxu0 0
    %972 = vmatprep.subr.bf16.mxu0 0
    %973 = vmatpush1.bf16.msra.mxu0 0
    %974 = vmatprep.subr.bf16.mxu0 0
    %975 = vmatpush1.bf16.msra.mxu0 0
    %976 = vmatprep.subr.bf16.mxu0 0
    %977 = vmatpush1.bf16.msra.mxu0 0
    %978 = vmatprep.subr.bf16.mxu0 0
    %979 = vmatpush1.bf16.msra.mxu0 0
    %980 = vmatprep.subr.bf16.mxu0 0
    %981 = vmatpush1.bf16.msra.mxu0 0
    %982 = vmatprep.subr.bf16.mxu0 0
    %983 = vmatpush1.bf16.msra.mxu0 0
    %984 = vmatprep.subr.bf16.mxu0 0
    %985 = vmatpush1.bf16.msra.mxu0 0
    %986 = vmatprep.mubr.bf16.mxu0 0
    %987 = vmatmul.mubr.bf16.gmra.mrb[0].mxu0 %v882
    %v988 = vpop.f32.mrb[0].mxu0
    %v989 = vadd.f32 %v904, %v988
    %v990 = vpop.f32.mrb[0].mxu0
    %v991 = vpop.f32.mrb[0].mxu0
    %v992 = vpop.f32.mrb[0].mxu0
    %993 = vdwg.mxu0
    %v994 = vmax.f32 %v989, 0.0
    %995 = vst [vmem:[#allocation2] sm:$0x3] %v994
    // Predicated region
    $region22: #{_lambda_.5} parent=1 // pred_check
      _
    $region23: #{_lambda_.5} parent=1 // pred_check_branch
      %997 = sbr.rel (0) target = $region25
    $region24: #{_lambda_.5} parent=1 // pred_region
      %s999 = ssub.s32 32, 32
      %1000 = vsyncadd [#allocation3], %s999
      %s1002 = sshll.u32 [#allocation2], 4
      %s1003 = int_to_ptr.vmem [resolvable:$true] %s1002
      %1005 = dma.vmem_to_hbm [thread:$0]  %s1003, 32, %s5, [#allocation3]
    $region25: #{_lambda_.5} parent=1 // pred_fallthru
      _
    // Predicated region
    $region26: #{_lambda_.5} parent=1 // pred_check
      _
    $region27: #{_lambda_.5} parent=1 // pred_check_branch
      %1007 = sbr.rel (0) target = $region29
    $region28: #{_lambda_.5} parent=1 // pred_region
      %1008 = dma.done [#allocation3], 32
    $region29: #{_lambda_.5} parent=1 // pred_fallthru
      _
    %1009 = vsyncpa [#allocation3], 1

// kernel: _lambda_.4
$region0: #{_lambda_.4}
  #allocation0 [shape = 'u32[]', space=smem, size = 0x4, offset = 0x4, fixed_abs, tag = 'smem constant byte address 0x4 - core index']
  #allocation1 [shape = 'u32[144,128]{1,0:T(1,128)}', space=vmem, size = 0x12000, scoped, tag = 'internal scratch']
  %s0 = inlined_call_operand.vmem [shape: bf16[18,2048], index: 0, kind: input, shape index: {}]
  %s1 = inlined_call_operand.vmem [shape: bf16[2048,128], index: 1, kind: input, shape index: {}]
  %s2 = inlined_call_operand.vmem [shape: f32[1,128], index: 2, kind: input, shape index: {}]
  %s3 = inlined_call_operand.vmem [shape: bf16[18,128], index: 3, kind: output, shape index: {}]
  %s4 = sld [smem:[#allocation0]]
  $region22: #{_lambda_.4} parent=0
    _
  %s6 = ssub.s32 1, %s4
  %s7 = scalar_select 0, %s6, %s4
  // Predicated region
  $region2: #{_lambda_.4} parent=0 // pred_check
    _
  $region3: #{_lambda_.4} parent=0 // pred_check_branch
    %9 = sbr.rel (0) target = $region5
  $region4: #{_lambda_.4} parent=0 // pred_region
    _
  $region5: #{_lambda_.4} parent=0 // pred_fallthru
    _
  // Predicated region
  $region6: #{_lambda_.4} parent=0 // pred_check
    _
  $region7: #{_lambda_.4} parent=0 // pred_check_branch
    %11 = sbr.rel (0) target = $region9
  $region8: #{_lambda_.4} parent=0 // pred_region
    _
  $region9: #{_lambda_.4} parent=0 // pred_fallthru
    _
  // Predicated region
  $region10: #{_lambda_.4} parent=0 // pred_check
    _
  $region11: #{_lambda_.4} parent=0 // pred_check_branch
    %13 = sbr.rel (0) target = $region13
  $region12: #{_lambda_.4} parent=0 // pred_region
    _
  $region13: #{_lambda_.4} parent=0 // pred_fallthru
    _
  %v15 = vld [vmem:[%s0] sm:$0xff]
  %v16 = vld [vmem:[%s0 + $0x8] sm:$0xff]
  %v17 = vld [vmem:[%s0 + $0x10] sm:$0xff]
  %v18 = vld [vmem:[%s0 + $0x18] sm:$0xff]
  %v19 = vld [vmem:[%s0 + $0x20] sm:$0xff]
  %v20 = vld [vmem:[%s0 + $0x28] sm:$0xff]
  %v21 = vld [vmem:[%s0 + $0x30] sm:$0xff]
  %v22 = vld [vmem:[%s0 + $0x38] sm:$0xff]
  %v23 = vld [vmem:[%s0 + $0x40] sm:$0xff]
  %v24 = vld [vmem:[%s0 + $0x48] sm:$0xff]
  %v25 = vld [vmem:[%s0 + $0x50] sm:$0xff]
  %v26 = vld [vmem:[%s0 + $0x58] sm:$0xff]
  %v27 = vld [vmem:[%s0 + $0x60] sm:$0xff]
  %v28 = vld [vmem:[%s0 + $0x68] sm:$0xff]
  %v29 = vld [vmem:[%s0 + $0x70] sm:$0xff]
  %v30 = vld [vmem:[%s0 + $0x78] sm:$0xff]
  %v31 = vld [vmem:[%s0 + $0x80] sm:$0x11]
  %v32 = vld [vmem:[%s0 + $0x88] sm:$0x11]
  %v33 = vld [vmem:[%s0 + $0x90] sm:$0x11]
  %v34 = vld [vmem:[%s0 + $0x98] sm:$0x11]
  %v35 = vld [vmem:[%s0 + $0xa0] sm:$0x11]
  %v36 = vld [vmem:[%s0 + $0xa8] sm:$0x11]
  %v37 = vld [vmem:[%s0 + $0xb0] sm:$0x11]
  %v38 = vld [vmem:[%s0 + $0xb8] sm:$0x11]
  %v39 = vld [vmem:[%s1] sm:$0xf]
  %v40 = vld [vmem:[%s1 + $0x4] sm:$0xf]
  %v41 = vld [vmem:[%s1 + $0x8] sm:$0xf]
  %v42 = vld [vmem:[%s1 + $0xc] sm:$0xf]
  %v43 = vld [vmem:[%s1 + $0x10] sm:$0xf]
  %v44 = vld [vmem:[%s1 + $0x14] sm:$0xf]
  %v45 = vld [vmem:[%s1 + $0x18] sm:$0xf]
  %v46 = vld [vmem:[%s1 + $0x1c] sm:$0xf]
  %v47 = vld [vmem:[%s1 + $0x20] sm:$0xf]
  %v48 = vld [vmem:[%s1 + $0x24] sm:$0xf]
  %v49 = vld [vmem:[%s1 + $0x28] sm:$0xf]
  %v50 = vld [vmem:[%s1 + $0x2c] sm:$0xf]
  %v51 = vld [vmem:[%s1 + $0x30] sm:$0xf]
  %v52 = vld [vmem:[%s1 + $0x34] sm:$0xf]
  %v53 = vld [vmem:[%s1 + $0x38] sm:$0xf]
  %v54 = vld [vmem:[%s1 + $0x3c] sm:$0xf]
  %v55 = vld [vmem:[%s1 + $0x40] sm:$0xf]
  %v56 = vld [vmem:[%s1 + $0x44] sm:$0xf]
  %v57 = vld [vmem:[%s1 + $0x48] sm:$0xf]
  %v58 = vld [vmem:[%s1 + $0x4c] sm:$0xf]
  %v59 = vld [vmem:[%s1 + $0x50] sm:$0xf]
  %v60 = vld [vmem:[%s1 + $0x54] sm:$0xf]
  %v61 = vld [vmem:[%s1 + $0x58] sm:$0xf]
  %v62 = vld [vmem:[%s1 + $0x5c] sm:$0xf]
  %v63 = vld [vmem:[%s1 + $0x60] sm:$0xf]
  %v64 = vld [vmem:[%s1 + $0x64] sm:$0xf]
  %v65 = vld [vmem:[%s1 + $0x68] sm:$0xf]
  %v66 = vld [vmem:[%s1 + $0x6c] sm:$0xf]
  %v67 = vld [vmem:[%s1 + $0x70] sm:$0xf]
  %v68 = vld [vmem:[%s1 + $0x74] sm:$0xf]
  %v69 = vld [vmem:[%s1 + $0x78] sm:$0xf]
  %v70 = vld [vmem:[%s1 + $0x7c] sm:$0xf]
  %v71 = vld [vmem:[%s1 + $0x80] sm:$0xf]
  %v72 = vld [vmem:[%s1 + $0x84] sm:$0xf]
  %v73 = vld [vmem:[%s1 + $0x88] sm:$0xf]
  %v74 = vld [vmem:[%s1 + $0x8c] sm:$0xf]
  %v75 = vld [vmem:[%s1 + $0x90] sm:$0xf]
  %v76 = vld [vmem:[%s1 + $0x94] sm:$0xf]
  %v77 = vld [vmem:[%s1 + $0x98] sm:$0xf]
  %v78 = vld [vmem:[%s1 + $0x9c] sm:$0xf]
  %v79 = vld [vmem:[%s1 + $0xa0] sm:$0xf]
  %v80 = vld [vmem:[%s1 + $0xa4] sm:$0xf]
  %v81 = vld [vmem:[%s1 + $0xa8] sm:$0xf]
  %v82 = vld [vmem:[%s1 + $0xac] sm:$0xf]
  %v83 = vld [vmem:[%s1 + $0xb0] sm:$0xf]
  %v84 = vld [vmem:[%s1 + $0xb4] sm:$0xf]
  %v85 = vld [vmem:[%s1 + $0xb8] sm:$0xf]
  %v86 = vld [vmem:[%s1 + $0xbc] sm:$0xf]
  %v87 = vld [vmem:[%s1 + $0xc0] sm:$0xf]
  %v88 = vld [vmem:[%s1 + $0xc4] sm:$0xf]
  %v89 = vld [vmem:[%s1 + $0xc8] sm:$0xf]
  %v90 = vld [vmem:[%s1 + $0xcc] sm:$0xf]
  %v91 = vld [vmem:[%s1 + $0xd0] sm:$0xf]
  %v92 = vld [vmem:[%s1 + $0xd4] sm:$0xf]
  %v93 = vld [vmem:[%s1 + $0xd8] sm:$0xf]
  %v94 = vld [vmem:[%s1 + $0xdc] sm:$0xf]
  %v95 = vld [vmem:[%s1 + $0xe0] sm:$0xf]
  %v96 = vld [vmem:[%s1 + $0xe4] sm:$0xf]
  %v97 = vld [vmem:[%s1 + $0xe8] sm:$0xf]
  %v98 = vld [vmem:[%s1 + $0xec] sm:$0xf]
  %v99 = vld [vmem:[%s1 + $0xf0] sm:$0xf]
  %v100 = vld [vmem:[%s1 + $0xf4] sm:$0xf]
  %v101 = vld [vmem:[%s1 + $0xf8] sm:$0xf]
  %v102 = vld [vmem:[%s1 + $0xfc] sm:$0xf]
  %v103 = vld [vmem:[%s1 + $0x100] sm:$0xf]
  %v104 = vld [vmem:[%s1 + $0x104] sm:$0xf]
  %v105 = vld [vmem:[%s1 + $0x108] sm:$0xf]
  %v106 = vld [vmem:[%s1 + $0x10c] sm:$0xf]
  %v107 = vld [vmem:[%s1 + $0x110] sm:$0xf]
  %v108 = vld [vmem:[%s1 + $0x114] sm:$0xf]
  %v109 = vld [vmem:[%s1 + $0x118] sm:$0xf]
  %v110 = vld [vmem:[%s1 + $0x11c] sm:$0xf]
  %v111 = vld [vmem:[%s1 + $0x120] sm:$0xf]
  %v112 = vld [vmem:[%s1 + $0x124] sm:$0xf]
  %v113 = vld [vmem:[%s1 + $0x128] sm:$0xf]
  %v114 = vld [vmem:[%s1 + $0x12c] sm:$0xf]
  %v115 = vld [vmem:[%s1 + $0x130] sm:$0xf]
  %v116 = vld [vmem:[%s1 + $0x134] sm:$0xf]
  %v117 = vld [vmem:[%s1 + $0x138] sm:$0xf]
  %v118 = vld [vmem:[%s1 + $0x13c] sm:$0xf]
  %v119 = vld [vmem:[%s1 + $0x140] sm:$0xf]
  %v120 = vld [vmem:[%s1 + $0x144] sm:$0xf]
  %v121 = vld [vmem:[%s1 + $0x148] sm:$0xf]
  %v122 = vld [vmem:[%s1 + $0x14c] sm:$0xf]
  %v123 = vld [vmem:[%s1 + $0x150] sm:$0xf]
  %v124 = vld [vmem:[%s1 + $0x154] sm:$0xf]
  %v125 = vld [vmem:[%s1 + $0x158] sm:$0xf]
  %v126 = vld [vmem:[%s1 + $0x15c] sm:$0xf]
  %v127 = vld [vmem:[%s1 + $0x160] sm:$0xf]
  %v128 = vld [vmem:[%s1 + $0x164] sm:$0xf]
  %v129 = vld [vmem:[%s1 + $0x168] sm:$0xf]
  %v130 = vld [vmem:[%s1 + $0x16c] sm:$0xf]
  %v131 = vld [vmem:[%s1 + $0x170] sm:$0xf]
  %v132 = vld [vmem:[%s1 + $0x174] sm:$0xf]
  %v133 = vld [vmem:[%s1 + $0x178] sm:$0xf]
  %v134 = vld [vmem:[%s1 + $0x17c] sm:$0xf]
  %v135 = vld [vmem:[%s1 + $0x180] sm:$0xf]
  %v136 = vld [vmem:[%s1 + $0x184] sm:$0xf]
  %v137 = vld [vmem:[%s1 + $0x188] sm:$0xf]
  %v138 = vld [vmem:[%s1 + $0x18c] sm:$0xf]
  %v139 = vld [vmem:[%s1 + $0x190] sm:$0xf]
  %v140 = vld [vmem:[%s1 + $0x194] sm:$0xf]
  %v141 = vld [vmem:[%s1 + $0x198] sm:$0xf]
  %v142 = vld [vmem:[%s1 + $0x19c] sm:$0xf]
  %v143 = vld [vmem:[%s1 + $0x1a0] sm:$0xf]
  %v144 = vld [vmem:[%s1 + $0x1a4] sm:$0xf]
  %v145 = vld [vmem:[%s1 + $0x1a8] sm:$0xf]
  %v146 = vld [vmem:[%s1 + $0x1ac] sm:$0xf]
  %v147 = vld [vmem:[%s1 + $0x1b0] sm:$0xf]
  %v148 = vld [vmem:[%s1 + $0x1b4] sm:$0xf]
  %v149 = vld [vmem:[%s1 + $0x1b8] sm:$0xf]
  %v150 = vld [vmem:[%s1 + $0x1bc] sm:$0xf]
  %v151 = vld [vmem:[%s1 + $0x1c0] sm:$0xf]
  %v152 = vld [vmem:[%s1 + $0x1c4] sm:$0xf]
  %v153 = vld [vmem:[%s1 + $0x1c8] sm:$0xf]
  %v154 = vld [vmem:[%s1 + $0x1cc] sm:$0xf]
  %v155 = vld [vmem:[%s1 + $0x1d0] sm:$0xf]
  %v156 = vld [vmem:[%s1 + $0x1d4] sm:$0xf]
  %v157 = vld [vmem:[%s1 + $0x1d8] sm:$0xf]
  %v158 = vld [vmem:[%s1 + $0x1dc] sm:$0xf]
  %v159 = vld [vmem:[%s1 + $0x1e0] sm:$0xf]
  %v160 = vld [vmem:[%s1 + $0x1e4] sm:$0xf]
  %v161 = vld [vmem:[%s1 + $0x1e8] sm:$0xf]
  %v162 = vld [vmem:[%s1 + $0x1ec] sm:$0xf]
  %v163 = vld [vmem:[%s1 + $0x1f0] sm:$0xf]
  %v164 = vld [vmem:[%s1 + $0x1f4] sm:$0xf]
  %v165 = vld [vmem:[%s1 + $0x1f8] sm:$0xf]
  %v166 = vld [vmem:[%s1 + $0x1fc] sm:$0xf]
  %v167 = vld [vmem:[%s1 + $0x200] sm:$0xf]
  %v168 = vld [vmem:[%s1 + $0x204] sm:$0xf]
  %v169 = vld [vmem:[%s1 + $0x208] sm:$0xf]
  %v170 = vld [vmem:[%s1 + $0x20c] sm:$0xf]
  %v171 = vld [vmem:[%s1 + $0x210] sm:$0xf]
  %v172 = vld [vmem:[%s1 + $0x214] sm:$0xf]
  %v173 = vld [vmem:[%s1 + $0x218] sm:$0xf]
  %v174 = vld [vmem:[%s1 + $0x21c] sm:$0xf]
  %v175 = vld [vmem:[%s1 + $0x220] sm:$0xf]
  %v176 = vld [vmem:[%s1 + $0x224] sm:$0xf]
  %v177 = vld [vmem:[%s1 + $0x228] sm:$0xf]
  %v178 = vld [vmem:[%s1 + $0x22c] sm:$0xf]
  %v179 = vld [vmem:[%s1 + $0x230] sm:$0xf]
  %v180 = vld [vmem:[%s1 + $0x234] sm:$0xf]
  %v181 = vld [vmem:[%s1 + $0x238] sm:$0xf]
  %v182 = vld [vmem:[%s1 + $0x23c] sm:$0xf]
  %v183 = vld [vmem:[%s1 + $0x240] sm:$0xf]
  %v184 = vld [vmem:[%s1 + $0x244] sm:$0xf]
  %v185 = vld [vmem:[%s1 + $0x248] sm:$0xf]
  %v186 = vld [vmem:[%s1 + $0x24c] sm:$0xf]
  %v187 = vld [vmem:[%s1 + $0x250] sm:$0xf]
  %v188 = vld [vmem:[%s1 + $0x254] sm:$0xf]
  %v189 = vld [vmem:[%s1 + $0x258] sm:$0xf]
  %v190 = vld [vmem:[%s1 + $0x25c] sm:$0xf]
  %v191 = vld [vmem:[%s1 + $0x260] sm:$0xf]
  %v192 = vld [vmem:[%s1 + $0x264] sm:$0xf]
  %v193 = vld [vmem:[%s1 + $0x268] sm:$0xf]
  %v194 = vld [vmem:[%s1 + $0x26c] sm:$0xf]
  %v195 = vld [vmem:[%s1 + $0x270] sm:$0xf]
  %v196 = vld [vmem:[%s1 + $0x274] sm:$0xf]
  %v197 = vld [vmem:[%s1 + $0x278] sm:$0xf]
  %v198 = vld [vmem:[%s1 + $0x27c] sm:$0xf]
  %v199 = vld [vmem:[%s1 + $0x280] sm:$0xf]
  %v200 = vld [vmem:[%s1 + $0x284] sm:$0xf]
  %v201 = vld [vmem:[%s1 + $0x288] sm:$0xf]
  %v202 = vld [vmem:[%s1 + $0x28c] sm:$0xf]
  %v203 = vld [vmem:[%s1 + $0x290] sm:$0xf]
  %v204 = vld [vmem:[%s1 + $0x294] sm:$0xf]
  %v205 = vld [vmem:[%s1 + $0x298] sm:$0xf]
  %v206 = vld [vmem:[%s1 + $0x29c] sm:$0xf]
  %v207 = vld [vmem:[%s1 + $0x2a0] sm:$0xf]
  %v208 = vld [vmem:[%s1 + $0x2a4] sm:$0xf]
  %v209 = vld [vmem:[%s1 + $0x2a8] sm:$0xf]
  %v210 = vld [vmem:[%s1 + $0x2ac] sm:$0xf]
  %v211 = vld [vmem:[%s1 + $0x2b0] sm:$0xf]
  %v212 = vld [vmem:[%s1 + $0x2b4] sm:$0xf]
  %v213 = vld [vmem:[%s1 + $0x2b8] sm:$0xf]
  %v214 = vld [vmem:[%s1 + $0x2bc] sm:$0xf]
  %v215 = vld [vmem:[%s1 + $0x2c0] sm:$0xf]
  %v216 = vld [vmem:[%s1 + $0x2c4] sm:$0xf]
  %v217 = vld [vmem:[%s1 + $0x2c8] sm:$0xf]
  %v218 = vld [vmem:[%s1 + $0x2cc] sm:$0xf]
  %v219 = vld [vmem:[%s1 + $0x2d0] sm:$0xf]
  %v220 = vld [vmem:[%s1 + $0x2d4] sm:$0xf]
  %v221 = vld [vmem:[%s1 + $0x2d8] sm:$0xf]
  %v222 = vld [vmem:[%s1 + $0x2dc] sm:$0xf]
  %v223 = vld [vmem:[%s1 + $0x2e0] sm:$0xf]
  %v224 = vld [vmem:[%s1 + $0x2e4] sm:$0xf]
  %v225 = vld [vmem:[%s1 + $0x2e8] sm:$0xf]
  %v226 = vld [vmem:[%s1 + $0x2ec] sm:$0xf]
  %v227 = vld [vmem:[%s1 + $0x2f0] sm:$0xf]
  %v228 = vld [vmem:[%s1 + $0x2f4] sm:$0xf]
  %v229 = vld [vmem:[%s1 + $0x2f8] sm:$0xf]
  %v230 = vld [vmem:[%s1 + $0x2fc] sm:$0xf]
  %v231 = vld [vmem:[%s1 + $0x300] sm:$0xf]
  %v232 = vld [vmem:[%s1 + $0x304] sm:$0xf]
  %v233 = vld [vmem:[%s1 + $0x308] sm:$0xf]
  %v234 = vld [vmem:[%s1 + $0x30c] sm:$0xf]
  %v235 = vld [vmem:[%s1 + $0x310] sm:$0xf]
  %v236 = vld [vmem:[%s1 + $0x314] sm:$0xf]
  %v237 = vld [vmem:[%s1 + $0x318] sm:$0xf]
  %v238 = vld [vmem:[%s1 + $0x31c] sm:$0xf]
  %v239 = vld [vmem:[%s1 + $0x320] sm:$0xf]
  %v240 = vld [vmem:[%s1 + $0x324] sm:$0xf]
  %v241 = vld [vmem:[%s1 + $0x328] sm:$0xf]
  %v242 = vld [vmem:[%s1 + $0x32c] sm:$0xf]
  %v243 = vld [vmem:[%s1 + $0x330] sm:$0xf]
  %v244 = vld [vmem:[%s1 + $0x334] sm:$0xf]
  %v245 = vld [vmem:[%s1 + $0x338] sm:$0xf]
  %v246 = vld [vmem:[%s1 + $0x33c] sm:$0xf]
  %v247 = vld [vmem:[%s1 + $0x340] sm:$0xf]
  %v248 = vld [vmem:[%s1 + $0x344] sm:$0xf]
  %v249 = vld [vmem:[%s1 + $0x348] sm:$0xf]
  %v250 = vld [vmem:[%s1 + $0x34c] sm:$0xf]
  %v251 = vld [vmem:[%s1 + $0x350] sm:$0xf]
  %v252 = vld [vmem:[%s1 + $0x354] sm:$0xf]
  %v253 = vld [vmem:[%s1 + $0x358] sm:$0xf]
  %v254 = vld [vmem:[%s1 + $0x35c] sm:$0xf]
  %v255 = vld [vmem:[%s1 + $0x360] sm:$0xf]
  %v256 = vld [vmem:[%s1 + $0x364] sm:$0xf]
  %v257 = vld [vmem:[%s1 + $0x368] sm:$0xf]
  %v258 = vld [vmem:[%s1 + $0x36c] sm:$0xf]
  %v259 = vld [vmem:[%s1 + $0x370] sm:$0xf]
  %v260 = vld [vmem:[%s1 + $0x374] sm:$0xf]
  %v261 = vld [vmem:[%s1 + $0x378] sm:$0xf]
  %v262 = vld [vmem:[%s1 + $0x37c] sm:$0xf]
  %v263 = vld [vmem:[%s1 + $0x380] sm:$0xf]
  %v264 = vld [vmem:[%s1 + $0x384] sm:$0xf]
  %v265 = vld [vmem:[%s1 + $0x388] sm:$0xf]
  %v266 = vld [vmem:[%s1 + $0x38c] sm:$0xf]
  %v267 = vld [vmem:[%s1 + $0x390] sm:$0xf]
  %v268 = vld [vmem:[%s1 + $0x394] sm:$0xf]
  %v269 = vld [vmem:[%s1 + $0x398] sm:$0xf]
  %v270 = vld [vmem:[%s1 + $0x39c] sm:$0xf]
  %v271 = vld [vmem:[%s1 + $0x3a0] sm:$0xf]
  %v272 = vld [vmem:[%s1 + $0x3a4] sm:$0xf]
  %v273 = vld [vmem:[%s1 + $0x3a8] sm:$0xf]
  %v274 = vld [vmem:[%s1 + $0x3ac] sm:$0xf]
  %v275 = vld [vmem:[%s1 + $0x3b0] sm:$0xf]
  %v276 = vld [vmem:[%s1 + $0x3b4] sm:$0xf]
  %v277 = vld [vmem:[%s1 + $0x3b8] sm:$0xf]
  %v278 = vld [vmem:[%s1 + $0x3bc] sm:$0xf]
  %v279 = vld [vmem:[%s1 + $0x3c0] sm:$0xf]
  %v280 = vld [vmem:[%s1 + $0x3c4] sm:$0xf]
  %v281 = vld [vmem:[%s1 + $0x3c8] sm:$0xf]
  %v282 = vld [vmem:[%s1 + $0x3cc] sm:$0xf]
  %v283 = vld [vmem:[%s1 + $0x3d0] sm:$0xf]
  %v284 = vld [vmem:[%s1 + $0x3d4] sm:$0xf]
  %v285 = vld [vmem:[%s1 + $0x3d8] sm:$0xf]
  %v286 = vld [vmem:[%s1 + $0x3dc] sm:$0xf]
  %v287 = vld [vmem:[%s1 + $0x3e0] sm:$0xf]
  %v288 = vld [vmem:[%s1 + $0x3e4] sm:$0xf]
  %v289 = vld [vmem:[%s1 + $0x3e8] sm:$0xf]
  %v290 = vld [vmem:[%s1 + $0x3ec] sm:$0xf]
  %v291 = vld [vmem:[%s1 + $0x3f0] sm:$0xf]
  %v292 = vld [vmem:[%s1 + $0x3f4] sm:$0xf]
  %v293 = vld [vmem:[%s1 + $0x3f8] sm:$0xf]
  %v294 = vld [vmem:[%s1 + $0x3fc] sm:$0xf]
  %v295 = vld [vmem:[%s2] sm:$0x1]
  %v297 = vlaneseq
  %v298 = vshrl.u32 %v297, 7
  %v299 = vsub.s32 0, %v298
  %v300 = vrot.slane %v295, %v299
  %v326 = vunpack.c.l.b16 %v15
  %v327 = vunpack.c.h.b16 %v15
  %v328 = vunpack.c.l.b16 %v16
  %v329 = vunpack.c.h.b16 %v16
  %v330 = vunpack.c.l.b16 %v17
  %v331 = vunpack.c.h.b16 %v17
  %v332 = vunpack.c.l.b16 %v18
  %v333 = vunpack.c.h.b16 %v18
  %v334 = vunpack.c.l.b16 %v19
  %v335 = vunpack.c.h.b16 %v19
  %v336 = vunpack.c.l.b16 %v20
  %v337 = vunpack.c.h.b16 %v20
  %v338 = vunpack.c.l.b16 %v21
  %v339 = vunpack.c.h.b16 %v21
  %v340 = vunpack.c.l.b16 %v22
  %v341 = vunpack.c.h.b16 %v22
  %v342 = vunpack.c.l.b16 %v23
  %v343 = vunpack.c.h.b16 %v23
  %v344 = vunpack.c.l.b16 %v24
  %v345 = vunpack.c.h.b16 %v24
  %v346 = vunpack.c.l.b16 %v25
  %v347 = vunpack.c.h.b16 %v25
  %v348 = vunpack.c.l.b16 %v26
  %v349 = vunpack.c.h.b16 %v26
  %v350 = vunpack.c.l.b16 %v27
  %v351 = vunpack.c.h.b16 %v27
  %v352 = vunpack.c.l.b16 %v28
  %v353 = vunpack.c.h.b16 %v28
  %v354 = vunpack.c.l.b16 %v29
  %v355 = vunpack.c.h.b16 %v29
  %v356 = vunpack.c.l.b16 %v30
  %v357 = vunpack.c.h.b16 %v30
  %v358 = vunpack.c.l.b16 %v31
  %v359 = vunpack.c.h.b16 %v31
  %v360 = vunpack.c.l.b16 %v32
  %v361 = vunpack.c.h.b16 %v32
  %v362 = vunpack.c.l.b16 %v33
  %v363 = vunpack.c.h.b16 %v33
  %v364 = vunpack.c.l.b16 %v34
  %v365 = vunpack.c.h.b16 %v34
  %v366 = vunpack.c.l.b16 %v35
  %v367 = vunpack.c.h.b16 %v35
  %v368 = vunpack.c.l.b16 %v36
  %v369 = vunpack.c.h.b16 %v36
  %v370 = vunpack.c.l.b16 %v37
  %v371 = vunpack.c.h.b16 %v37
  %v372 = vunpack.c.l.b16 %v38
  %v373 = vunpack.c.h.b16 %v38
  %v374 = vpack.c.b16 %v342, %v326
  %v375 = vpack.c.b16 %v343, %v327
  %v376 = vpack.c.b16 %v344, %v328
  %v377 = vpack.c.b16 %v345, %v329
  %v378 = vpack.c.b16 %v346, %v330
  %v379 = vpack.c.b16 %v347, %v331
  %v380 = vpack.c.b16 %v348, %v332
  %v381 = vpack.c.b16 %v349, %v333
  %v382 = vpack.c.b16 %v350, %v334
  %v383 = vpack.c.b16 %v351, %v335
  %v384 = vpack.c.b16 %v352, %v336
  %v385 = vpack.c.b16 %v353, %v337
  %v386 = vpack.c.b16 %v354, %v338
  %v387 = vpack.c.b16 %v355, %v339
  %v388 = vpack.c.b16 %v356, %v340
  %v389 = vpack.c.b16 %v357, %v341
  %v390 = vpack.c.b16 %v358, %v358
  %v391 = vpack.c.b16 %v359, %v359
  %v392 = vpack.c.b16 %v360, %v360
  %v393 = vpack.c.b16 %v361, %v361
  %v394 = vpack.c.b16 %v362, %v362
  %v395 = vpack.c.b16 %v363, %v363
  %v396 = vpack.c.b16 %v364, %v364
  %v397 = vpack.c.b16 %v365, %v365
  %v398 = vpack.c.b16 %v366, %v366
  %v399 = vpack.c.b16 %v367, %v367
  %v400 = vpack.c.b16 %v368, %v368
  %v401 = vpack.c.b16 %v369, %v369
  %v402 = vpack.c.b16 %v370, %v370
  %v403 = vpack.c.b16 %v371, %v371
  %v404 = vpack.c.b16 %v372, %v372
  %v405 = vpack.c.b16 %v373, %v373
  %v694 = vunpack.c.l.b16 %v39
  %v695 = vunpack.c.l.b16 %v40
  %v696 = vunpack.c.l.b16 %v41
  %v697 = vunpack.c.l.b16 %v42
  %v698 = vunpack.c.l.b16 %v43
  %v699 = vunpack.c.l.b16 %v44
  %v700 = vunpack.c.l.b16 %v45
  %v701 = vunpack.c.l.b16 %v46
  %v702 = vunpack.c.l.b16 %v47
  %v703 = vunpack.c.l.b16 %v48
  %v704 = vunpack.c.l.b16 %v49
  %v705 = vunpack.c.l.b16 %v50
  %v706 = vunpack.c.l.b16 %v51
  %v707 = vunpack.c.l.b16 %v52
  %v708 = vunpack.c.l.b16 %v53
  %v709 = vunpack.c.l.b16 %v54
  %v710 = vunpack.c.l.b16 %v55
  %v711 = vunpack.c.l.b16 %v56
  %v712 = vunpack.c.l.b16 %v57
  %v713 = vunpack.c.l.b16 %v58
  %v714 = vunpack.c.l.b16 %v59
  %v715 = vunpack.c.l.b16 %v60
  %v716 = vunpack.c.l.b16 %v61
  %v717 = vunpack.c.l.b16 %v62
  %v718 = vunpack.c.l.b16 %v63
  %v719 = vunpack.c.l.b16 %v64
  %v720 = vunpack.c.l.b16 %v65
  %v721 = vunpack.c.l.b16 %v66
  %v722 = vunpack.c.l.b16 %v67
  %v723 = vunpack.c.l.b16 %v68
  %v724 = vunpack.c.l.b16 %v69
  %v725 = vunpack.c.l.b16 %v70
  %v726 = vunpack.c.l.b16 %v71
  %v727 = vunpack.c.l.b16 %v72
  %v728 = vunpack.c.l.b16 %v73
  %v729 = vunpack.c.l.b16 %v74
  %v730 = vunpack.c.l.b16 %v75
  %v731 = vunpack.c.l.b16 %v76
  %v732 = vunpack.c.l.b16 %v77
  %v733 = vunpack.c.l.b16 %v78
  %v734 = vunpack.c.l.b16 %v79
  %v735 = vunpack.c.l.b16 %v80
  %v736 = vunpack.c.l.b16 %v81
  %v737 = vunpack.c.l.b16 %v82
  %v738 = vunpack.c.l.b16 %v83
  %v739 = vunpack.c.l.b16 %v84
  %v740 = vunpack.c.l.b16 %v85
  %v741 = vunpack.c.l.b16 %v86
  %v742 = vunpack.c.l.b16 %v87
  %v743 = vunpack.c.l.b16 %v88
  %v744 = vunpack.c.l.b16 %v89
  %v745 = vunpack.c.l.b16 %v90
  %v746 = vunpack.c.l.b16 %v91
  %v747 = vunpack.c.l.b16 %v92
  %v748 = vunpack.c.l.b16 %v93
  %v749 = vunpack.c.l.b16 %v94
  %v750 = vunpack.c.l.b16 %v95
  %v751 = vunpack.c.l.b16 %v96
  %v752 = vunpack.c.l.b16 %v97
  %v753 = vunpack.c.l.b16 %v98
  %v754 = vunpack.c.l.b16 %v99
  %v755 = vunpack.c.l.b16 %v100
  %v756 = vunpack.c.l.b16 %v101
  %v757 = vunpack.c.l.b16 %v102
  %v758 = vunpack.c.l.b16 %v103
  %v759 = vunpack.c.l.b16 %v104
  %v760 = vunpack.c.l.b16 %v105
  %v761 = vunpack.c.l.b16 %v106
  %v762 = vunpack.c.l.b16 %v107
  %v763 = vunpack.c.l.b16 %v108
  %v764 = vunpack.c.l.b16 %v109
  %v765 = vunpack.c.l.b16 %v110
  %v766 = vunpack.c.l.b16 %v111
  %v767 = vunpack.c.l.b16 %v112
  %v768 = vunpack.c.l.b16 %v113
  %v769 = vunpack.c.l.b16 %v114
  %v770 = vunpack.c.l.b16 %v115
  %v771 = vunpack.c.l.b16 %v116
  %v772 = vunpack.c.l.b16 %v117
  %v773 = vunpack.c.l.b16 %v118
  %v774 = vunpack.c.l.b16 %v119
  %v775 = vunpack.c.l.b16 %v120
  %v776 = vunpack.c.l.b16 %v121
  %v777 = vunpack.c.l.b16 %v122
  %v778 = vunpack.c.l.b16 %v123
  %v779 = vunpack.c.l.b16 %v124
  %v780 = vunpack.c.l.b16 %v125
  %v781 = vunpack.c.l.b16 %v126
  %v782 = vunpack.c.l.b16 %v127
  %v783 = vunpack.c.l.b16 %v128
  %v784 = vunpack.c.l.b16 %v129
  %v785 = vunpack.c.l.b16 %v130
  %v786 = vunpack.c.l.b16 %v131
  %v787 = vunpack.c.l.b16 %v132
  %v788 = vunpack.c.l.b16 %v133
  %v789 = vunpack.c.l.b16 %v134
  %v790 = vunpack.c.l.b16 %v135
  %v791 = vunpack.c.l.b16 %v136
  %v792 = vunpack.c.l.b16 %v137
  %v793 = vunpack.c.l.b16 %v138
  %v794 = vunpack.c.l.b16 %v139
  %v795 = vunpack.c.l.b16 %v140
  %v796 = vunpack.c.l.b16 %v141
  %v797 = vunpack.c.l.b16 %v142
  %v798 = vunpack.c.l.b16 %v143
  %v799 = vunpack.c.l.b16 %v144
  %v800 = vunpack.c.l.b16 %v145
  %v801 = vunpack.c.l.b16 %v146
  %v802 = vunpack.c.l.b16 %v147
  %v803 = vunpack.c.l.b16 %v148
  %v804 = vunpack.c.l.b16 %v149
  %v805 = vunpack.c.l.b16 %v150
  %v806 = vunpack.c.l.b16 %v151
  %v807 = vunpack.c.l.b16 %v152
  %v808 = vunpack.c.l.b16 %v153
  %v809 = vunpack.c.l.b16 %v154
  %v810 = vunpack.c.l.b16 %v155
  %v811 = vunpack.c.l.b16 %v156
  %v812 = vunpack.c.l.b16 %v157
  %v813 = vunpack.c.l.b16 %v158
  %v814 = vunpack.c.l.b16 %v159
  %v815 = vunpack.c.l.b16 %v160
  %v816 = vunpack.c.l.b16 %v161
  %v817 = vunpack.c.l.b16 %v162
  %v818 = vunpack.c.l.b16 %v163
  %v819 = vunpack.c.l.b16 %v164
  %v820 = vunpack.c.l.b16 %v165
  %v821 = vunpack.c.l.b16 %v166
  %v822 = vunpack.c.l.b16 %v167
  %v823 = vunpack.c.l.b16 %v168
  %v824 = vunpack.c.l.b16 %v169
  %v825 = vunpack.c.l.b16 %v170
  %v826 = vunpack.c.l.b16 %v171
  %v827 = vunpack.c.l.b16 %v172
  %v828 = vunpack.c.l.b16 %v173
  %v829 = vunpack.c.l.b16 %v174
  %v830 = vunpack.c.l.b16 %v175
  %v831 = vunpack.c.l.b16 %v176
  %v832 = vunpack.c.l.b16 %v177
  %v833 = vunpack.c.l.b16 %v178
  %v834 = vunpack.c.l.b16 %v179
  %v835 = vunpack.c.l.b16 %v180
  %v836 = vunpack.c.l.b16 %v181
  %v837 = vunpack.c.l.b16 %v182
  %v838 = vunpack.c.l.b16 %v183
  %v839 = vunpack.c.l.b16 %v184
  %v840 = vunpack.c.l.b16 %v185
  %v841 = vunpack.c.l.b16 %v186
  %v842 = vunpack.c.l.b16 %v187
  %v843 = vunpack.c.l.b16 %v188
  %v844 = vunpack.c.l.b16 %v189
  %v845 = vunpack.c.l.b16 %v190
  %v846 = vunpack.c.l.b16 %v191
  %v847 = vunpack.c.l.b16 %v192
  %v848 = vunpack.c.l.b16 %v193
  %v849 = vunpack.c.l.b16 %v194
  %v850 = vunpack.c.l.b16 %v195
  %v851 = vunpack.c.l.b16 %v196
  %v852 = vunpack.c.l.b16 %v197
  %v853 = vunpack.c.l.b16 %v198
  %v854 = vunpack.c.l.b16 %v199
  %v855 = vunpack.c.l.b16 %v200
  %v856 = vunpack.c.l.b16 %v201
  %v857 = vunpack.c.l.b16 %v202
  %v858 = vunpack.c.l.b16 %v203
  %v859 = vunpack.c.l.b16 %v204
  %v860 = vunpack.c.l.b16 %v205
  %v861 = vunpack.c.l.b16 %v206
  %v862 = vunpack.c.l.b16 %v207
  %v863 = vunpack.c.l.b16 %v208
  %v864 = vunpack.c.l.b16 %v209
  %v865 = vunpack.c.l.b16 %v210
  %v866 = vunpack.c.l.b16 %v211
  %v867 = vunpack.c.l.b16 %v212
  %v868 = vunpack.c.l.b16 %v213
  %v869 = vunpack.c.l.b16 %v214
  %v870 = vunpack.c.l.b16 %v215
  %v871 = vunpack.c.l.b16 %v216
  %v872 = vunpack.c.l.b16 %v217
  %v873 = vunpack.c.l.b16 %v218
  %v874 = vunpack.c.l.b16 %v219
  %v875 = vunpack.c.l.b16 %v220
  %v876 = vunpack.c.l.b16 %v221
  %v877 = vunpack.c.l.b16 %v222
  %v878 = vunpack.c.l.b16 %v223
  %v879 = vunpack.c.l.b16 %v224
  %v880 = vunpack.c.l.b16 %v225
  %v881 = vunpack.c.l.b16 %v226
  %v882 = vunpack.c.l.b16 %v227
  %v883 = vunpack.c.l.b16 %v228
  %v884 = vunpack.c.l.b16 %v229
  %v885 = vunpack.c.l.b16 %v230
  %v886 = vunpack.c.l.b16 %v231
  %v887 = vunpack.c.l.b16 %v232
  %v888 = vunpack.c.l.b16 %v233
  %v889 = vunpack.c.l.b16 %v234
  %v890 = vunpack.c.l.b16 %v235
  %v891 = vunpack.c.l.b16 %v236
  %v892 = vunpack.c.l.b16 %v237
  %v893 = vunpack.c.l.b16 %v238
  %v894 = vunpack.c.l.b16 %v239
  %v895 = vunpack.c.l.b16 %v240
  %v896 = vunpack.c.l.b16 %v241
  %v897 = vunpack.c.l.b16 %v242
  %v898 = vunpack.c.l.b16 %v243
  %v899 = vunpack.c.l.b16 %v244
  %v900 = vunpack.c.l.b16 %v245
  %v901 = vunpack.c.l.b16 %v246
  %v902 = vunpack.c.l.b16 %v247
  %v903 = vunpack.c.l.b16 %v248
  %v904 = vunpack.c.l.b16 %v249
  %v905 = vunpack.c.l.b16 %v250
  %v906 = vunpack.c.l.b16 %v251
  %v907 = vunpack.c.l.b16 %v252
  %v908 = vunpack.c.l.b16 %v253
  %v909 = vunpack.c.l.b16 %v254
  %v910 = vunpack.c.l.b16 %v255
  %v911 = vunpack.c.l.b16 %v256
  %v912 = vunpack.c.l.b16 %v257
  %v913 = vunpack.c.l.b16 %v258
  %v914 = vunpack.c.l.b16 %v259
  %v915 = vunpack.c.l.b16 %v260
  %v916 = vunpack.c.l.b16 %v261
  %v917 = vunpack.c.l.b16 %v262
  %v918 = vunpack.c.l.b16 %v263
  %v919 = vunpack.c.l.b16 %v264
  %v920 = vunpack.c.l.b16 %v265
  %v921 = vunpack.c.l.b16 %v266
  %v922 = vunpack.c.l.b16 %v267
  %v923 = vunpack.c.l.b16 %v268
  %v924 = vunpack.c.l.b16 %v269
  %v925 = vunpack.c.l.b16 %v270
  %v926 = vunpack.c.l.b16 %v271
  %v927 = vunpack.c.l.b16 %v272
  %v928 = vunpack.c.l.b16 %v273
  %v929 = vunpack.c.l.b16 %v274
  %v930 = vunpack.c.l.b16 %v275
  %v931 = vunpack.c.l.b16 %v276
  %v932 = vunpack.c.l.b16 %v277
  %v933 = vunpack.c.l.b16 %v278
  %v934 = vunpack.c.l.b16 %v279
  %v935 = vunpack.c.l.b16 %v280
  %v936 = vunpack.c.l.b16 %v281
  %v937 = vunpack.c.l.b16 %v282
  %v938 = vunpack.c.l.b16 %v283
  %v939 = vunpack.c.l.b16 %v284
  %v940 = vunpack.c.l.b16 %v285
  %v941 = vunpack.c.l.b16 %v286
  %v942 = vunpack.c.l.b16 %v287
  %v943 = vunpack.c.l.b16 %v288
  %v944 = vunpack.c.l.b16 %v289
  %v945 = vunpack.c.l.b16 %v290
  %v946 = vunpack.c.l.b16 %v291
  %v947 = vunpack.c.l.b16 %v292
  %v948 = vunpack.c.l.b16 %v293
  %v949 = vunpack.c.l.b16 %v294
  %v950 = vpack.c.b16 %v695, %v694
  %v951 = vpack.c.b16 %v697, %v696
  %v952 = vpack.c.b16 %v699, %v698
  %v953 = vpack.c.b16 %v701, %v700
  %v954 = vpack.c.b16 %v703, %v702
  %v955 = vpack.c.b16 %v705, %v704
  %v956 = vpack.c.b16 %v707, %v706
  %v957 = vpack.c.b16 %v709, %v708
  %v958 = vpack.c.b16 %v711, %v710
  %v959 = vpack.c.b16 %v713, %v712
  %v960 = vpack.c.b16 %v715, %v714
  %v961 = vpack.c.b16 %v717, %v716
  %v962 = vpack.c.b16 %v719, %v718
  %v963 = vpack.c.b16 %v721, %v720
  %v964 = vpack.c.b16 %v723, %v722
  %v965 = vpack.c.b16 %v725, %v724
  %v966 = vpack.c.b16 %v727, %v726
  %v967 = vpack.c.b16 %v729, %v728
  %v968 = vpack.c.b16 %v731, %v730
  %v969 = vpack.c.b16 %v733, %v732
  %v970 = vpack.c.b16 %v735, %v734
  %v971 = vpack.c.b16 %v737, %v736
  %v972 = vpack.c.b16 %v739, %v738
  %v973 = vpack.c.b16 %v741, %v740
  %v974 = vpack.c.b16 %v743, %v742
  %v975 = vpack.c.b16 %v745, %v744
  %v976 = vpack.c.b16 %v747, %v746
  %v977 = vpack.c.b16 %v749, %v748
  %v978 = vpack.c.b16 %v751, %v750
  %v979 = vpack.c.b16 %v753, %v752
  %v980 = vpack.c.b16 %v755, %v754
  %v981 = vpack.c.b16 %v757, %v756
  %v982 = vpack.c.b16 %v759, %v758
  %v983 = vpack.c.b16 %v761, %v760
  %v984 = vpack.c.b16 %v763, %v762
  %v985 = vpack.c.b16 %v765, %v764
  %v986 = vpack.c.b16 %v767, %v766
  %v987 = vpack.c.b16 %v769, %v768
  %v988 = vpack.c.b16 %v771, %v770
  %v989 = vpack.c.b16 %v773, %v772
  %v990 = vpack.c.b16 %v775, %v774
  %v991 = vpack.c.b16 %v777, %v776
  %v992 = vpack.c.b16 %v779, %v778
  %v993 = vpack.c.b16 %v781, %v780
  %v994 = vpack.c.b16 %v783, %v782
  %v995 = vpack.c.b16 %v785, %v784
  %v996 = vpack.c.b16 %v787, %v786
  %v997 = vpack.c.b16 %v789, %v788
  %v998 = vpack.c.b16 %v791, %v790
  %v999 = vpack.c.b16 %v793, %v792
  %v1000 = vpack.c.b16 %v795, %v794
  %v1001 = vpack.c.b16 %v797, %v796
  %v1002 = vpack.c.b16 %v799, %v798
  %v1003 = vpack.c.b16 %v801, %v800
  %v1004 = vpack.c.b16 %v803, %v802
  %v1005 = vpack.c.b16 %v805, %v804
  %v1006 = vpack.c.b16 %v807, %v806
  %v1007 = vpack.c.b16 %v809, %v808
  %v1008 = vpack.c.b16 %v811, %v810
  %v1009 = vpack.c.b16 %v813, %v812
  %v1010 = vpack.c.b16 %v815, %v814
  %v1011 = vpack.c.b16 %v817, %v816
  %v1012 = vpack.c.b16 %v819, %v818
  %v1013 = vpack.c.b16 %v821, %v820
  %v1014 = vpack.c.b16 %v823, %v822
  %v1015 = vpack.c.b16 %v825, %v824
  %v1016 = vpack.c.b16 %v827, %v826
  %v1017 = vpack.c.b16 %v829, %v828
  %v1018 = vpack.c.b16 %v831, %v830
  %v1019 = vpack.c.b16 %v833, %v832
  %v1020 = vpack.c.b16 %v835, %v834
  %v1021 = vpack.c.b16 %v837, %v836
  %v1022 = vpack.c.b16 %v839, %v838
  %v1023 = vpack.c.b16 %v841, %v840
  %v1024 = vpack.c.b16 %v843, %v842
  %v1025 = vpack.c.b16 %v845, %v844
  %v1026 = vpack.c.b16 %v847, %v846
  %v1027 = vpack.c.b16 %v849, %v848
  %v1028 = vpack.c.b16 %v851, %v850
  %v1029 = vpack.c.b16 %v853, %v852
  %v1030 = vpack.c.b16 %v855, %v854
  %v1031 = vpack.c.b16 %v857, %v856
  %v1032 = vpack.c.b16 %v859, %v858
  %v1033 = vpack.c.b16 %v861, %v860
  %v1034 = vpack.c.b16 %v863, %v862
  %v1035 = vpack.c.b16 %v865, %v864
  %v1036 = vpack.c.b16 %v867, %v866
  %v1037 = vpack.c.b16 %v869, %v868
  %v1038 = vpack.c.b16 %v871, %v870
  %v1039 = vpack.c.b16 %v873, %v872
  %v1040 = vpack.c.b16 %v875, %v874
  %v1041 = vpack.c.b16 %v877, %v876
  %v1042 = vpack.c.b16 %v879, %v878
  %v1043 = vpack.c.b16 %v881, %v880
  %v1044 = vpack.c.b16 %v883, %v882
  %v1045 = vpack.c.b16 %v885, %v884
  %v1046 = vpack.c.b16 %v887, %v886
  %v1047 = vpack.c.b16 %v889, %v888
  %v1048 = vpack.c.b16 %v891, %v890
  %v1049 = vpack.c.b16 %v893, %v892
  %v1050 = vpack.c.b16 %v895, %v894
  %v1051 = vpack.c.b16 %v897, %v896
  %v1052 = vpack.c.b16 %v899, %v898
  %v1053 = vpack.c.b16 %v901, %v900
  %v1054 = vpack.c.b16 %v903, %v902
  %v1055 = vpack.c.b16 %v905, %v904
  %v1056 = vpack.c.b16 %v907, %v906
  %v1057 = vpack.c.b16 %v909, %v908
  %v1058 = vpack.c.b16 %v911, %v910
  %v1059 = vpack.c.b16 %v913, %v912
  %v1060 = vpack.c.b16 %v915, %v914
  %v1061 = vpack.c.b16 %v917, %v916
  %v1062 = vpack.c.b16 %v919, %v918
  %v1063 = vpack.c.b16 %v921, %v920
  %v1064 = vpack.c.b16 %v923, %v922
  %v1065 = vpack.c.b16 %v925, %v924
  %v1066 = vpack.c.b16 %v927, %v926
  %v1067 = vpack.c.b16 %v929, %v928
  %v1068 = vpack.c.b16 %v931, %v930
  %v1069 = vpack.c.b16 %v933, %v932
  %v1070 = vpack.c.b16 %v935, %v934
  %v1071 = vpack.c.b16 %v937, %v936
  %v1072 = vpack.c.b16 %v939, %v938
  %v1073 = vpack.c.b16 %v941, %v940
  %v1074 = vpack.c.b16 %v943, %v942
  %v1075 = vpack.c.b16 %v945, %v944
  %v1076 = vpack.c.b16 %v947, %v946
  %v1077 = vpack.c.b16 %v949, %v948
  %1206 = vmatprep.subr.bf16.mxu0 0
  %1207 = vmatpush1.bf16.msra.mxu0 %v950
  %1208 = vmatprep.subr.bf16.mxu0 0
  %1209 = vmatpush1.bf16.msra.mxu0 %v951
  %1210 = vmatprep.subr.bf16.mxu0 0
  %1211 = vmatpush1.bf16.msra.mxu0 %v952
  %1212 = vmatprep.subr.bf16.mxu0 0
  %1213 = vmatpush1.bf16.msra.mxu0 %v953
  %1214 = vmatprep.subr.bf16.mxu0 0
  %1215 = vmatpush1.bf16.msra.mxu0 %v954
  %1216 = vmatprep.subr.bf16.mxu0 0
  %1217 = vmatpush1.bf16.msra.mxu0 %v955
  %1218 = vmatprep.subr.bf16.mxu0 0
  %1219 = vmatpush1.bf16.msra.mxu0 %v956
  %1220 = vmatprep.subr.bf16.mxu0 0
  %1221 = vmatpush1.bf16.msra.mxu0 %v957
  %1222 = vmatprep.subr.bf16.mxu0 0
  %1223 = vmatpush1.bf16.msra.mxu0 %v958
  %1224 = vmatprep.subr.bf16.mxu0 0
  %1225 = vmatpush1.bf16.msra.mxu0 %v959
  %1226 = vmatprep.subr.bf16.mxu0 0
  %1227 = vmatpush1.bf16.msra.mxu0 %v960
  %1228 = vmatprep.subr.bf16.mxu0 0
  %1229 = vmatpush1.bf16.msra.mxu0 %v961
  %1230 = vmatprep.subr.bf16.mxu0 0
  %1231 = vmatpush1.bf16.msra.mxu0 %v962
  %1232 = vmatprep.subr.bf16.mxu0 0
  %1233 = vmatpush1.bf16.msra.mxu0 %v963
  %1234 = vmatprep.subr.bf16.mxu0 0
  %1235 = vmatpush1.bf16.msra.mxu0 %v964
  %1236 = vmatprep.subr.bf16.mxu0 0
  %1237 = vmatpush1.bf16.msra.mxu0 %v965
  %1238 = vmatprep.mubr.bf16.mxu0 %v375
  %1239 = vmatmul.mubr.bf16.gmra.mrb[0].mxu0 %v374
  %v1240 = vpop.f32.mrb[0].mxu0
  %v1241 = vadd.f32 %v300, %v1240
  %v1242 = vpop.f32.mrb[0].mxu0
  %v1243 = vpop.f32.mrb[0].mxu0
  %v1244 = vadd.f32 %v300, %v1243
  %v1245 = vpop.f32.mrb[0].mxu0
  %1246 = vmatprep.mubr.bf16.mxu0 %v391
  %1247 = vmatmul.mubr.bf16.gmra.mrb[0].mxu0 %v390
  %v1248 = vpop.f32.mrb[0].mxu0
  %v1249 = vadd.f32 %v300, %v1248
  %v1250 = vpop.f32.mrb[0].mxu0
  %v1251 = vpop.f32.mrb[0].mxu0
  %v1252 = vpop.f32.mrb[0].mxu0
  %1253 = vdwg.mxu0
  %1254 = vmatprep.subr.bf16.mxu0 0
  %1255 = vmatpush1.bf16.msra.mxu0 %v966
  %1256 = vmatprep.subr.bf16.mxu0 0
  %1257 = vmatpush1.bf16.msra.mxu0 %v967
  %1258 = vmatprep.subr.bf16.mxu0 0
  %1259 = vmatpush1.bf16.msra.mxu0 %v968
  %1260 = vmatprep.subr.bf16.mxu0 0
  %1261 = vmatpush1.bf16.msra.mxu0 %v969
  %1262 = vmatprep.subr.bf16.mxu0 0
  %1263 = vmatpush1.bf16.msra.mxu0 %v970
  %1264 = vmatprep.subr.bf16.mxu0 0
  %1265 = vmatpush1.bf16.msra.mxu0 %v971
  %1266 = vmatprep.subr.bf16.mxu0 0
  %1267 = vmatpush1.bf16.msra.mxu0 %v972
  %1268 = vmatprep.subr.bf16.mxu0 0
  %1269 = vmatpush1.bf16.msra.mxu0 %v973
  %1270 = vmatprep.subr.bf16.mxu0 0
  %1271 = vmatpush1.bf16.msra.mxu0 %v974
  %1272 = vmatprep.subr.bf16.mxu0 0
  %1273 = vmatpush1.bf16.msra.mxu0 %v975
  %1274 = vmatprep.subr.bf16.mxu0 0
  %1275 = vmatpush1.bf16.msra.mxu0 %v976
  %1276 = vmatprep.subr.bf16.mxu0 0
  %1277 = vmatpush1.bf16.msra.mxu0 %v977
  %1278 = vmatprep.subr.bf16.mxu0 0
  %1279 = vmatpush1.bf16.msra.mxu0 %v978
  %1280 = vmatprep.subr.bf16.mxu0 0
  %1281 = vmatpush1.bf16.msra.mxu0 %v979
  %1282 = vmatprep.subr.bf16.mxu0 0
  %1283 = vmatpush1.bf16.msra.mxu0 %v980
  %1284 = vmatprep.subr.bf16.mxu0 0
  %1285 = vmatpush1.bf16.msra.mxu0 %v981
  %1286 = vmatprep.mubr.bf16.mxu0 %v377
  %1287 = vmatmul.mubr.bf16.gmra.mrb[0].mxu0 %v376
  %v1288 = vpop.f32.mrb[0].mxu0
  %v1289 = vadd.f32 %v1241, %v1288
  %v1290 = vpop.f32.mrb[0].mxu0
  %v1291 = vpop.f32.mrb[0].mxu0
  %v1292 = vadd.f32 %v1244, %v1291
  %v1293 = vpop.f32.mrb[0].mxu0
  %1294 = vmatprep.mubr.bf16.mxu0 %v393
  %1295 = vmatmul.mubr.bf16.gmra.mrb[0].mxu0 %v392
  %v1296 = vpop.f32.mrb[0].mxu0
  %v1297 = vadd.f32 %v1249, %v1296
  %v1298 = vpop.f32.mrb[0].mxu0
  %v1299 = vpop.f32.mrb[0].mxu0
  %v1300 = vpop.f32.mrb[0].mxu0
  %1301 = vdwg.mxu0
  %1302 = vmatprep.subr.bf16.mxu0 0
  %1303 = vmatpush1.bf16.msra.mxu0 %v982
  %1304 = vmatprep.subr.bf16.mxu0 0
  %1305 = vmatpush1.bf16.msra.mxu0 %v983
  %1306 = vmatprep.subr.bf16.mxu0 0
  %1307 = vmatpush1.bf16.msra.mxu0 %v984
  %1308 = vmatprep.subr.bf16.mxu0 0
  %1309 = vmatpush1.bf16.msra.mxu0 %v985
  %1310 = vmatprep.subr.bf16.mxu0 0
  %1311 = vmatpush1.bf16.msra.mxu0 %v986
  %1312 = vmatprep.subr.bf16.mxu0 0
  %1313 = vmatpush1.bf16.msra.mxu0 %v987
  %1314 = vmatprep.subr.bf16.mxu0 0
  %1315 = vmatpush1.bf16.msra.mxu0 %v988
  %1316 = vmatprep.subr.bf16.mxu0 0
  %1317 = vmatpush1.bf16.msra.mxu0 %v989
  %1318 = vmatprep.subr.bf16.mxu0 0
  %1319 = vmatpush1.bf16.msra.mxu0 %v990
  %1320 = vmatprep.subr.bf16.mxu0 0
  %1321 = vmatpush1.bf16.msra.mxu0 %v991
  %1322 = vmatprep.subr.bf16.mxu0 0
  %1323 = vmatpush1.bf16.msra.mxu0 %v992
  %1324 = vmatprep.subr.bf16.mxu0 0
  %1325 = vmatpush1.bf16.msra.mxu0 %v993
  %1326 = vmatprep.subr.bf16.mxu0 0
  %1327 = vmatpush1.bf16.msra.mxu0 %v994
  %1328 = vmatprep.subr.bf16.mxu0 0
  %1329 = vmatpush1.bf16.msra.mxu0 %v995
  %1330 = vmatprep.subr.bf16.mxu0 0
  %1331 = vmatpush1.bf16.msra.mxu0 %v996
  %1332 = vmatprep.subr.bf16.mxu0 0
  %1333 = vmatpush1.bf16.msra.mxu0 %v997
  %1334 = vmatprep.mubr.bf16.mxu0 %v379
  %1335 = vmatmul.mubr.bf16.gmra.mrb[0].mxu0 %v378
  %v1336 = vpop.f32.mrb[0].mxu0
  %v1337 = vadd.f32 %v1289, %v1336
  %v1338 = vpop.f32.mrb[0].mxu0
  %v1339 = vpop.f32.mrb[0].mxu0
  %v1340 = vadd.f32 %v1292, %v1339
  %v1341 = vpop.f32.mrb[0].mxu0
  %1342 = vmatprep.mubr.bf16.mxu0 %v395
  %1343 = vmatmul.mubr.bf16.gmra.mrb[0].mxu0 %v394
  %v1344 = vpop.f32.mrb[0].mxu0
  %v1345 = vadd.f32 %v1297, %v1344
  %v1346 = vpop.f32.mrb[0].mxu0
  %v1347 = vpop.f32.mrb[0].mxu0
  %v1348 = vpop.f32.mrb[0].mxu0
  %1349 = vdwg.mxu0
  %1350 = vmatprep.subr.bf16.mxu0 0
  %1351 = vmatpush1.bf16.msra.mxu0 %v998
  %1352 = vmatprep.subr.bf16.mxu0 0
  %1353 = vmatpush1.bf16.msra.mxu0 %v999
  %1354 = vmatprep.subr.bf16.mxu0 0
  %1355 = vmatpush1.bf16.msra.mxu0 %v1000
  %1356 = vmatprep.subr.bf16.mxu0 0
  %1357 = vmatpush1.bf16.msra.mxu0 %v1001
  %1358 = vmatprep.subr.bf16.mxu0 0
  %1359 = vmatpush1.bf16.msra.mxu0 %v1002
  %1360 = vmatprep.subr.bf16.mxu0 0
  %1361 = vmatpush1.bf16.msra.mxu0 %v1003
  %1362 = vmatprep.subr.bf16.mxu0 0
  %1363 = vmatpush1.bf16.msra.mxu0 %v1004
  %1364 = vmatprep.subr.bf16.mxu0 0
  %1365 = vmatpush1.bf16.msra.mxu0 %v1005
  %1366 = vmatprep.subr.bf16.mxu0 0
  %1367 = vmatpush1.bf16.msra.mxu0 %v1006
  %1368 = vmatprep.subr.bf16.mxu0 0
  %1369 = vmatpush1.bf16.msra.mxu0 %v1007
  %1370 = vmatprep.subr.bf16.mxu0 0
  %1371 = vmatpush1.bf16.msra.mxu0 %v1008
  %1372 = vmatprep.subr.bf16.mxu0 0
  %1373 = vmatpush1.bf16.msra.mxu0 %v1009
  %1374 = vmatprep.subr.bf16.mxu0 0
  %1375 = vmatpush1.bf16.msra.mxu0 %v1010
  %1376 = vmatprep.subr.bf16.mxu0 0
  %1377 = vmatpush1.bf16.msra.mxu0 %v1011
  %1378 = vmatprep.subr.bf16.mxu0 0
  %1379 = vmatpush1.bf16.msra.mxu0 %v1012
  %1380 = vmatprep.subr.bf16.mxu0 0
  %1381 = vmatpush1.bf16.msra.mxu0 %v1013
  %1382 = vmatprep.mubr.bf16.mxu0 %v381
  %1383 = vmatmul.mubr.bf16.gmra.mrb[0].mxu0 %v380
  %v1384 = vpop.f32.mrb[0].mxu0
  %v1385 = vadd.f32 %v1337, %v1384
  %v1386 = vpop.f32.mrb[0].mxu0
  %v1387 = vpop.f32.mrb[0].mxu0
  %v1388 = vadd.f32 %v1340, %v1387
  %v1389 = vpop.f32.mrb[0].mxu0
  %1390 = vmatprep.mubr.bf16.mxu0 %v397
  %1391 = vmatmul.mubr.bf16.gmra.mrb[0].mxu0 %v396
  %v1392 = vpop.f32.mrb[0].mxu0
  %v1393 = vadd.f32 %v1345, %v1392
  %v1394 = vpop.f32.mrb[0].mxu0
  %v1395 = vpop.f32.mrb[0].mxu0
  %v1396 = vpop.f32.mrb[0].mxu0
  %1397 = vdwg.mxu0
  %1398 = vmatprep.subr.bf16.mxu0 0
  %1399 = vmatpush1.bf16.msra.mxu0 %v1014
  %1400 = vmatprep.subr.bf16.mxu0 0
  %1401 = vmatpush1.bf16.msra.mxu0 %v1015
  %1402 = vmatprep.subr.bf16.mxu0 0
  %1403 = vmatpush1.bf16.msra.mxu0 %v1016
  %1404 = vmatprep.subr.bf16.mxu0 0
  %1405 = vmatpush1.bf16.msra.mxu0 %v1017
  %1406 = vmatprep.subr.bf16.mxu0 0
  %1407 = vmatpush1.bf16.msra.mxu0 %v1018
  %1408 = vmatprep.subr.bf16.mxu0 0
  %1409 = vmatpush1.bf16.msra.mxu0 %v1019
  %1410 = vmatprep.subr.bf16.mxu0 0
  %1411 = vmatpush1.bf16.msra.mxu0 %v1020
  %1412 = vmatprep.subr.bf16.mxu0 0
  %1413 = vmatpush1.bf16.msra.mxu0 %v1021
  %1414 = vmatprep.subr.bf16.mxu0 0
  %1415 = vmatpush1.bf16.msra.mxu0 %v1022
  %1416 = vmatprep.subr.bf16.mxu0 0
  %1417 = vmatpush1.bf16.msra.mxu0 %v1023
  %1418 = vmatprep.subr.bf16.mxu0 0
  %1419 = vmatpush1.bf16.msra.mxu0 %v1024
  %1420 = vmatprep.subr.bf16.mxu0 0
  %1421 = vmatpush1.bf16.msra.mxu0 %v1025
  %1422 = vmatprep.subr.bf16.mxu0 0
  %1423 = vmatpush1.bf16.msra.mxu0 %v1026
  %1424 = vmatprep.subr.bf16.mxu0 0
  %1425 = vmatpush1.bf16.msra.mxu0 %v1027
  %1426 = vmatprep.subr.bf16.mxu0 0
  %1427 = vmatpush1.bf16.msra.mxu0 %v1028
  %1428 = vmatprep.subr.bf16.mxu0 0
  %1429 = vmatpush1.bf16.msra.mxu0 %v1029
  %1430 = vmatprep.mubr.bf16.mxu0 %v383
  %1431 = vmatmul.mubr.bf16.gmra.mrb[0].mxu0 %v382
  %v1432 = vpop.f32.mrb[0].mxu0
  %v1433 = vadd.f32 %v1385, %v1432
  %v1434 = vpop.f32.mrb[0].mxu0
  %v1435 = vpop.f32.mrb[0].mxu0
  %v1436 = vadd.f32 %v1388, %v1435
  %v1437 = vpop.f32.mrb[0].mxu0
  %1438 = vmatprep.mubr.bf16.mxu0 %v399
  %1439 = vmatmul.mubr.bf16.gmra.mrb[0].mxu0 %v398
  %v1440 = vpop.f32.mrb[0].mxu0
  %v1441 = vadd.f32 %v1393, %v1440
  %v1442 = vpop.f32.mrb[0].mxu0
  %v1443 = vpop.f32.mrb[0].mxu0
  %v1444 = vpop.f32.mrb[0].mxu0
  %1445 = vdwg.mxu0
  %1446 = vmatprep.subr.bf16.mxu0 0
  %1447 = vmatpush1.bf16.msra.mxu0 %v1030
  %1448 = vmatprep.subr.bf16.mxu0 0
  %1449 = vmatpush1.bf16.msra.mxu0 %v1031
  %1450 = vmatprep.subr.bf16.mxu0 0
  %1451 = vmatpush1.bf16.msra.mxu0 %v1032
  %1452 = vmatprep.subr.bf16.mxu0 0
  %1453 = vmatpush1.bf16.msra.mxu0 %v1033
  %1454 = vmatprep.subr.bf16.mxu0 0
  %1455 = vmatpush1.bf16.msra.mxu0 %v1034
  %1456 = vmatprep.subr.bf16.mxu0 0
  %1457 = vmatpush1.bf16.msra.mxu0 %v1035
  %1458 = vmatprep.subr.bf16.mxu0 0
  %1459 = vmatpush1.bf16.msra.mxu0 %v1036
  %1460 = vmatprep.subr.bf16.mxu0 0
  %1461 = vmatpush1.bf16.msra.mxu0 %v1037
  %1462 = vmatprep.subr.bf16.mxu0 0
  %1463 = vmatpush1.bf16.msra.mxu0 %v1038
  %1464 = vmatprep.subr.bf16.mxu0 0
  %1465 = vmatpush1.bf16.msra.mxu0 %v1039
  %1466 = vmatprep.subr.bf16.mxu0 0
  %1467 = vmatpush1.bf16.msra.mxu0 %v1040
  %1468 = vmatprep.subr.bf16.mxu0 0
  %1469 = vmatpush1.bf16.msra.mxu0 %v1041
  %1470 = vmatprep.subr.bf16.mxu0 0
  %1471 = vmatpush1.bf16.msra.mxu0 %v1042
  %1472 = vmatprep.subr.bf16.mxu0 0
  %1473 = vmatpush1.bf16.msra.mxu0 %v1043
  %1474 = vmatprep.subr.bf16.mxu0 0
  %1475 = vmatpush1.bf16.msra.mxu0 %v1044
  %1476 = vmatprep.subr.bf16.mxu0 0
  %1477 = vmatpush1.bf16.msra.mxu0 %v1045
  %1478 = vmatprep.mubr.bf16.mxu0 %v385
  %1479 = vmatmul.mubr.bf16.gmra.mrb[0].mxu0 %v384
  %v1480 = vpop.f32.mrb[0].mxu0
  %v1481 = vadd.f32 %v1433, %v1480
  %v1482 = vpop.f32.mrb[0].mxu0
  %v1483 = vpop.f32.mrb[0].mxu0
  %v1484 = vadd.f32 %v1436, %v1483
  %v1485 = vpop.f32.mrb[0].mxu0
  %1486 = vmatprep.mubr.bf16.mxu0 %v401
  %1487 = vmatmul.mubr.bf16.gmra.mrb[0].mxu0 %v400
  %v1488 = vpop.f32.mrb[0].mxu0
  %v1489 = vadd.f32 %v1441, %v1488
  %v1490 = vpop.f32.mrb[0].mxu0
  %v1491 = vpop.f32.mrb[0].mxu0
  %v1492 = vpop.f32.mrb[0].mxu0
  %1493 = vdwg.mxu0
  %1494 = vmatprep.subr.bf16.mxu0 0
  %1495 = vmatpush1.bf16.msra.mxu0 %v1046
  %1496 = vmatprep.subr.bf16.mxu0 0
  %1497 = vmatpush1.bf16.msra.mxu0 %v1047
  %1498 = vmatprep.subr.bf16.mxu0 0
  %1499 = vmatpush1.bf16.msra.mxu0 %v1048
  %1500 = vmatprep.subr.bf16.mxu0 0
  %1501 = vmatpush1.bf16.msra.mxu0 %v1049
  %1502 = vmatprep.subr.bf16.mxu0 0
  %1503 = vmatpush1.bf16.msra.mxu0 %v1050
  %1504 = vmatprep.subr.bf16.mxu0 0
  %1505 = vmatpush1.bf16.msra.mxu0 %v1051
  %1506 = vmatprep.subr.bf16.mxu0 0
  %1507 = vmatpush1.bf16.msra.mxu0 %v1052
  %1508 = vmatprep.subr.bf16.mxu0 0
  %1509 = vmatpush1.bf16.msra.mxu0 %v1053
  %1510 = vmatprep.subr.bf16.mxu0 0
  %1511 = vmatpush1.bf16.msra.mxu0 %v1054
  %1512 = vmatprep.subr.bf16.mxu0 0
  %1513 = vmatpush1.bf16.msra.mxu0 %v1055
  %1514 = vmatprep.subr.bf16.mxu0 0
  %1515 = vmatpush1.bf16.msra.mxu0 %v1056
  %1516 = vmatprep.subr.bf16.mxu0 0
  %1517 = vmatpush1.bf16.msra.mxu0 %v1057
  %1518 = vmatprep.subr.bf16.mxu0 0
  %1519 = vmatpush1.bf16.msra.mxu0 %v1058
  %1520 = vmatprep.subr.bf16.mxu0 0
  %1521 = vmatpush1.bf16.msra.mxu0 %v1059
  %1522 = vmatprep.subr.bf16.mxu0 0
  %1523 = vmatpush1.bf16.msra.mxu0 %v1060
  %1524 = vmatprep.subr.bf16.mxu0 0
  %1525 = vmatpush1.bf16.msra.mxu0 %v1061
  %1526 = vmatprep.mubr.bf16.mxu0 %v387
  %1527 = vmatmul.mubr.bf16.gmra.mrb[0].mxu0 %v386
  %v1528 = vpop.f32.mrb[0].mxu0
  %v1529 = vadd.f32 %v1481, %v1528
  %v1530 = vpop.f32.mrb[0].mxu0
  %v1531 = vpop.f32.mrb[0].mxu0
  %v1532 = vadd.f32 %v1484, %v1531
  %v1533 = vpop.f32.mrb[0].mxu0
  %1534 = vmatprep.mubr.bf16.mxu0 %v403
  %1535 = vmatmul.mubr.bf16.gmra.mrb[0].mxu0 %v402
  %v1536 = vpop.f32.mrb[0].mxu0
  %v1537 = vadd.f32 %v1489, %v1536
  %v1538 = vpop.f32.mrb[0].mxu0
  %v1539 = vpop.f32.mrb[0].mxu0
  %v1540 = vpop.f32.mrb[0].mxu0
  %1541 = vdwg.mxu0
  %1542 = vmatprep.subr.bf16.mxu0 0
  %1543 = vmatpush1.bf16.msra.mxu0 %v1062
  %1544 = vmatprep.subr.bf16.mxu0 0
  %1545 = vmatpush1.bf16.msra.mxu0 %v1063
  %1546 = vmatprep.subr.bf16.mxu0 0
  %1547 = vmatpush1.bf16.msra.mxu0 %v1064
  %1548 = vmatprep.subr.bf16.mxu0 0
  %1549 = vmatpush1.bf16.msra.mxu0 %v1065
  %1550 = vmatprep.subr.bf16.mxu0 0
  %1551 = vmatpush1.bf16.msra.mxu0 %v1066
  %1552 = vmatprep.subr.bf16.mxu0 0
  %1553 = vmatpush1.bf16.msra.mxu0 %v1067
  %1554 = vmatprep.subr.bf16.mxu0 0
  %1555 = vmatpush1.bf16.msra.mxu0 %v1068
  %1556 = vmatprep.subr.bf16.mxu0 0
  %1557 = vmatpush1.bf16.msra.mxu0 %v1069
  %1558 = vmatprep.subr.bf16.mxu0 0
  %1559 = vmatpush1.bf16.msra.mxu0 %v1070
  %1560 = vmatprep.subr.bf16.mxu0 0
  %1561 = vmatpush1.bf16.msra.mxu0 %v1071
  %1562 = vmatprep.subr.bf16.mxu0 0
  %1563 = vmatpush1.bf16.msra.mxu0 %v1072
  %1564 = vmatprep.subr.bf16.mxu0 0
  %1565 = vmatpush1.bf16.msra.mxu0 %v1073
  %1566 = vmatprep.subr.bf16.mxu0 0
  %1567 = vmatpush1.bf16.msra.mxu0 %v1074
  %1568 = vmatprep.subr.bf16.mxu0 0
  %1569 = vmatpush1.bf16.msra.mxu0 %v1075
  %1570 = vmatprep.subr.bf16.mxu0 0
  %1571 = vmatpush1.bf16.msra.mxu0 %v1076
  %1572 = vmatprep.subr.bf16.mxu0 0
  %1573 = vmatpush1.bf16.msra.mxu0 %v1077
  %1574 = vmatprep.mubr.bf16.mxu0 %v389
  %1575 = vmatmul.mubr.bf16.gmra.mrb[0].mxu0 %v388
  %v1576 = vpop.f32.mrb[0].mxu0
  %v1577 = vadd.f32 %v1529, %v1576
  %v1578 = vpop.f32.mrb[0].mxu0
  %v1579 = vpop.f32.mrb[0].mxu0
  %v1580 = vadd.f32 %v1532, %v1579
  %v1581 = vpop.f32.mrb[0].mxu0
  %1582 = vmatprep.mubr.bf16.mxu0 %v405
  %1583 = vmatmul.mubr.bf16.gmra.mrb[0].mxu0 %v404
  %v1584 = vpop.f32.mrb[0].mxu0
  %v1585 = vadd.f32 %v1537, %v1584
  %v1586 = vpop.f32.mrb[0].mxu0
  %v1587 = vpop.f32.mrb[0].mxu0
  %v1588 = vpop.f32.mrb[0].mxu0
  %1589 = vdwg.mxu0
  %v1590 = vmax.f32 %v1577, 0.0
  %v1591 = vmax.f32 %v1580, 0.0
  %v1592 = vmax.f32 %v1585, 0.0
  %v1593 = vpack.c.bf16 %v1591, %v1590
  %v1594 = vpack.c.bf16 %v1592, %v1592
  %v1597 = vunpack.c.l.b16 %v1593
  %v1598 = vunpack.c.h.b16 %v1593
  %v1599 = vunpack.c.l.b16 %v1594
  %v1600 = vpack.c.b16 %v1597, %v1597
  %v1601 = vpack.c.b16 %v1598, %v1598
  %v1602 = vpack.c.b16 %v1599, %v1599
  %1606 = vst [vmem:[%s3] sm:$0xf] %v1600
  %1607 = vst [vmem:[%s3 + $0x4] sm:$0xf] %v1601
  %1608 = vst [vmem:[%s3 + $0x8] sm:$0x1] %v1602
  // Predicated region
  $region14: #{_lambda_.4} parent=0 // pred_check
    _
  $region15: #{_lambda_.4} parent=0 // pred_check_branch
    %1610 = sbr.rel (0) target = $region17
  $region16: #{_lambda_.4} parent=0 // pred_region
    _
  $region17: #{_lambda_.4} parent=0 // pred_fallthru
    _
  // Predicated region
  $region18: #{_lambda_.4} parent=0 // pred_check
    _
  $region19: #{_lambda_.4} parent=0 // pred_check_branch
    %1612 = sbr.rel (0) target = $region21
  $region20: #{_lambda_.4} parent=0 // pred_region
    _
  $region21: #{_lambda_.4} parent=0 // pred_fallthru
    _

</llo_original>
